<compile_context>
chip_gen: v7x
topology: tpu7x:2x2x1
jax: 0.10.0
libtpu: 0.0.40
codegen_flags: <defaults>
</compile_context>

<pallas_src>
import functools
import math

import jax
import jax.numpy as jnp
from jax.experimental import pallas as pl
from jax.experimental.pallas import tpu as pltpu


def _round_up(x: int, m: int) -> int:
    return ((x + m - 1) // m) * m


def _cdiv(a: int, b: int) -> int:
    return -(-a // b)


# ---------------------------------------------------------------------------
# Fused MLP kernel: unrolled layer chain, activations stay in VMEM.
# ---------------------------------------------------------------------------
def _dmlp_fused_kernel(*refs, num_layers: int, dim_in: int, pad_in: bool):
    # refs = (x_ref, w_0..w_{L-1}, b_0..b_{L-1}, o_ref[, xpad_scratch])
    x_ref = refs[0]
    w_refs = refs[1:1 + num_layers]
    b_refs = refs[1 + num_layers:1 + 2 * num_layers]
    o_ref = refs[1 + 2 * num_layers]

    if pad_in:
        # Zero-pad x (tile_n, dim_in) -> (tile_n, K0) inside the kernel so the
        # wrapper never materializes a padded copy of x in HBM.
        xpad_ref = refs[2 + 2 * num_layers]
        xpad_ref[...] = jnp.zeros_like(xpad_ref)
        xpad_ref[:, :dim_in] = x_ref[...].astype(xpad_ref.dtype)
        h = xpad_ref[...]                              # f32 (tile_n, K0)
    else:
        h = x_ref[...].astype(jnp.float32)             # already 128-aligned

    for l in range(num_layers):                        # unrolled at trace time
        w = w_refs[l][...]                             # (k_l, n_l), padded 128-aligned
        # Cast activations to the param dtype (bf16 fast MXU path when params
        # are bf16); accumulate in f32 on the MXU.
        h = jnp.dot(h.astype(w.dtype), w, preferred_element_type=jnp.float32)
        h = h + b_refs[l][...].astype(jnp.float32)     # (1, n_l) broadcast, f32 epilogue
        if l != num_layers - 1:
            h = jnp.maximum(h, 0.0)
    o_ref[...] = h.astype(o_ref.dtype)


# ---------------------------------------------------------------------------
# Wrapper: tiling, VMEM budgeting, pallas_call.
# ---------------------------------------------------------------------------
def dmlp_forward_pallas(x, packed_params, dim_in, dim_out, *,
                        tile_n_max=1024, vmem_budget_bytes=48 * 1024 * 1024):
    """x: (N, dim_in). packed_params: list of (w_pad (k_l, n_l), b_pad (1, n_l))."""
    assert x.ndim == 2 and x.shape[1] == dim_in
    n = x.shape[0]
    num_layers = len(packed_params)
    ws = [w for w, _ in packed_params]
    bs = [b for _, b in packed_params]
    k0 = ws[0].shape[0]            # round_up(dim_in, 128)
    n_last = ws[-1].shape[1]       # round_up(dim_out, 128)
    pad_in = (dim_in % 128 != 0)

    # Guarantee at least one full 8-row sublane block for tiny N.
    n_rows = n
    if n_rows < 8:
        x = jnp.pad(x, ((0, 8 - n_rows), (0, 0)))
        n_rows = 8

    # --- VMEM budget -> row-tile cap -----------------------------------
    param_bytes = sum(int(a.size) * a.dtype.itemsize for a in ws + bs)
    p_max = max(max(w.shape) for w in ws)
    # double-buffered x/out tiles + in-kernel pad scratch + activation headroom
    bytes_per_row = 4 * (2 * dim_in + 2 * n_last + (k0 if pad_in else 0) + 3 * p_max)
    tile_cap = max(8, _round_up(min(tile_n_max, n_rows), 8))
    while tile_cap > 256 and param_bytes + tile_cap * bytes_per_row > vmem_budget_bytes:
        tile_cap //= 2

    # --- megacore-friendly grid with a small ragged remainder ----------
    g = _cdiv(n_rows, tile_cap)
    if g == 1 and n_rows >= 16:
        g = 2                       # >= 2 grid steps so both v7x TCs get work
    tile_n = max(8, _round_up(_cdiv(n_rows, g), 8))
    grid = (_cdiv(n_rows, tile_n),)

    # Explicit scoped-VMEM budget (v5e default 16 MiB is too small for real
    # configs; v7x physical VMEM is only 64 MiB).
    est = param_bytes + tile_n * bytes_per_row + (2 << 20)
    vmem_limit = int(min(64 << 20, max(32 << 20, est)))
    # TODO(synk): for param stacks that exceed ~48 MiB, stream weights per
    # layer instead of keeping them fully VMEM-resident.

    kernel = functools.partial(_dmlp_fused_kernel, num_layers=num_layers,
                               dim_in=dim_in, pad_in=pad_in)
    scratch = [pltpu.VMEM((tile_n, k0), jnp.float32)] if pad_in else []

    def run(single_buffer_params: bool):
        if single_buffer_params:
            def resident(shape):
                return pl.BlockSpec(shape, lambda i: (0,) * len(shape),
                                    pipeline_mode=pl.Buffered(1))
        else:
            def resident(shape):
                return pl.BlockSpec(shape, lambda i: (0,) * len(shape))

        in_specs = ([pl.BlockSpec((tile_n, dim_in), lambda i: (i, 0))]
                    + [resident(w.shape) for w in ws]
                    + [resident(b.shape) for b in bs])

        out = pl.pallas_call(
            kernel,
            out_shape=jax.ShapeDtypeStruct((n_rows, n_last), x.dtype),
            grid=grid,
            in_specs=in_specs,
            out_specs=pl.BlockSpec((tile_n, n_last), lambda i: (i, 0)),
            scratch_shapes=scratch,
            compiler_params=pltpu.CompilerParams(
                dimension_semantics=("parallel",),
                vmem_limit_bytes=vmem_limit),
        )(x, *ws, *bs)
        return jax.block_until_ready(out)

    try:
        out = run(True)
    except Exception:
        # Graceful degradation if Buffered(1) single-buffering is rejected by
        # this JAX/Mosaic version; genuine kernel errors re-raise below.
        out = run(False)

    return out[:n, :dim_out]


# ---------------------------------------------------------------------------
# Parameter initialization (mirrors DMLP.__init__ semantics)
# ---------------------------------------------------------------------------
def init_dmlp_params(key, dim_in, dim_out, dim_hidden, num_layers, bias=True,
                     weight_norm=True):
    params = []
    for l in range(num_layers):
        d_in = dim_in if l == 0 else dim_hidden
        d_out = dim_out if l == num_layers - 1 else dim_hidden
        key, kw, kb = jax.random.split(key, 3)
        bound = 1.0 / math.sqrt(float(d_in))        # nn.Linear default init
        w = jax.random.uniform(kw, (d_out, d_in), jnp.float32, -bound, bound)
        b = (jax.random.uniform(kb, (d_out,), jnp.float32, -bound, bound)
             if bias else jnp.zeros((d_out,), jnp.float32))

        if l == 0 and l != num_layers - 1:
            # torch.nn.init.constant_(lin.weight[:, 3:], 0.0); bias[3:] = 0
            w = w.at[:, 3:].set(0.0)
            b = b.at[3:].set(0.0)

        # nn.utils.weight_norm: w = g * v/||v|| with g = ||v|| at init — the
        # identity on the forward weights, so we skip the explicit division
        # (avoids 0/0 = NaN if a row of v is exactly zero).
        _ = weight_norm

        params.append((w, b))
    return params


def pack_dmlp_params(params, param_dtype=jnp.bfloat16):
    """Pre-transpose (x @ W^T form) and zero-pad each layer to 128-aligned
    (d_in, d_out).  Padded rows/cols/bias lanes are zero, so padded lanes stay
    exactly zero through the whole layer chain."""
    packed = []
    for w, b in params:
        d_out, d_in = w.shape
        k = _round_up(d_in, 128)
        n = _round_up(d_out, 128)
        wp = jnp.zeros((k, n), param_dtype).at[:d_in, :d_out].set(
            w.T.astype(param_dtype))
        bp = jnp.zeros((1, n), param_dtype).at[0, :d_out].set(
            b.astype(param_dtype))
        packed.append((wp, bp))
    return packed


if __name__ == "__main__":
    # Small shapes consistent with the module: xyz + 1 extra input channel,
    # 3-D deformation output, small hidden width.
    dim_in, dim_out, dim_hidden, num_layers = 4, 3, 32, 3
    n_points = 64

    key = jax.random.PRNGKey(0)
    key, kx = jax.random.split(key)
    x = jax.random.normal(kx, (n_points, dim_in), jnp.float32)

    params = init_dmlp_params(key, dim_in, dim_out, dim_hidden, num_layers)

    # Pure-JAX reference (full-precision matmuls so the reference is exact).
    ref = x
    for l, (w, b) in enumerate(params):
        ref = jnp.dot(ref, w.T, precision=jax.lax.Precision.HIGHEST) + b
        if l != num_layers - 1:
            ref = jnp.maximum(ref, 0.0)

    # f32 params: correctness / exactness check of the fused kernel.
    packed_f32 = pack_dmlp_params(params, param_dtype=jnp.float32)
    out_f32 = dmlp_forward_pallas(x, packed_f32, dim_in, dim_out)
    out_f32 = jax.block_until_ready(out_f32)
    assert out_f32.shape == (n_points, dim_out), out_f32.shape
    assert jnp.allclose(out_f32, ref, atol=1e-4, rtol=1e-4)

    # bf16 params: fast bf16 MXU path (halved weight VMEM / DMA traffic).
    packed_bf16 = pack_dmlp_params(params, param_dtype=jnp.bfloat16)
    out_bf16 = dmlp_forward_pallas(x, packed_bf16, dim_in, dim_out)
    out_bf16 = jax.block_until_ready(out_bf16)
    assert out_bf16.shape == (n_points, dim_out), out_bf16.shape
    assert jnp.allclose(out_bf16, ref, atol=5e-2, rtol=5e-2)

    print("KERNEL_OK")
</pallas_src>

<mosaic_0001>
module attributes {stable_mosaic.version = 11 : i64} {
  func.func @_dmlp_fused_kernel(%arg0: i32, %arg1: memref<32x4xf32, #tpu.memory_space<vmem>>, %arg2: memref<128x128xf32, #tpu.memory_space<vmem>>, %arg3: memref<128x128xf32, #tpu.memory_space<vmem>>, %arg4: memref<128x128xf32, #tpu.memory_space<vmem>>, %arg5: memref<1x128xf32, #tpu.memory_space<vmem>>, %arg6: memref<1x128xf32, #tpu.memory_space<vmem>>, %arg7: memref<1x128xf32, #tpu.memory_space<vmem>>, %arg8: memref<32x128xf32, #tpu.memory_space<vmem>>, %arg9: memref<32x128xf32, #tpu.memory_space<vmem>>) attributes {dimension_semantics = [#tpu.dimension_semantics<parallel>], iteration_bounds = array<i64: 2>, scalar_prefetch = 0 : i64, scratch_operands = 1 : i64, tpu.core_type = #tpu.core_type<tc>, window_params = [{transform_indices = @transform_0, window_bounds = array<i64: 32, 4>}, {pipeline_mode = #tpu.pipeline_mode<synchronous>, transform_indices = @transform_1, window_bounds = array<i64: 128, 128>}, {pipeline_mode = #tpu.pipeline_mode<synchronous>, transform_indices = @transform_2, window_bounds = array<i64: 128, 128>}, {pipeline_mode = #tpu.pipeline_mode<synchronous>, transform_indices = @transform_3, window_bounds = array<i64: 128, 128>}, {pipeline_mode = #tpu.pipeline_mode<synchronous>, transform_indices = @transform_4, window_bounds = array<i64: 1, 128>}, {pipeline_mode = #tpu.pipeline_mode<synchronous>, transform_indices = @transform_5, window_bounds = array<i64: 1, 128>}, {pipeline_mode = #tpu.pipeline_mode<synchronous>, transform_indices = @transform_6, window_bounds = array<i64: 1, 128>}, {transform_indices = @transform_7, window_bounds = array<i64: 32, 128>}]} {
    %cst = arith.constant 0.000000e+00 : f32
    %0 = vector.broadcast %cst : f32 to vector<32x128xf32>
    %c0 = arith.constant 0 : index
    %c0_0 = arith.constant 0 : index
    %1 = vector.load %arg9[%c0, %c0_0] : memref<32x128xf32, #tpu.memory_space<vmem>>, vector<32x128xf32>
    tpu.vector_store %arg9[%c0, %c0_0], %0 {strides = array<i32>} : memref<32x128xf32, #tpu.memory_space<vmem>>, vector<32x128xf32>,
    %c0_1 = arith.constant 0 : index
    %c0_2 = arith.constant 0 : index
    %2 = vector.load %arg1[%c0_1, %c0_2] : memref<32x4xf32, #tpu.memory_space<vmem>>, vector<32x4xf32>
    %c0_3 = arith.constant 0 : index
    %c0_4 = arith.constant 0 : index
    %3 = vector.load %arg9[%c0_3, %c0_4] : memref<32x128xf32, #tpu.memory_space<vmem>>, vector<32x4xf32>
    tpu.vector_store %arg9[%c0_3, %c0_4], %2 {strides = array<i32>} : memref<32x128xf32, #tpu.memory_space<vmem>>, vector<32x4xf32>,
    %c0_5 = arith.constant 0 : index
    %c0_6 = arith.constant 0 : index
    %4 = vector.load %arg9[%c0_5, %c0_6] : memref<32x128xf32, #tpu.memory_space<vmem>>, vector<32x128xf32>
    %c0_7 = arith.constant 0 : index
    %c0_8 = arith.constant 0 : index
    %5 = vector.load %arg2[%c0_7, %c0_8] : memref<128x128xf32, #tpu.memory_space<vmem>>, vector<128x128xf32>
    %cst_9 = arith.constant dense<0.000000e+00> : vector<32x128xf32>
    %6 = tpu.matmul %4, %5, %cst_9 {dimension_numbers = #tpu.dot_dimension_numbers<[1], [0], [0], [1], [0, 0, 1, 1], [], []>} : vector<32x128xf32>, vector<128x128xf32>, vector<32x128xf32> -> vector<32x128xf32>
    %c0_10 = arith.constant 0 : index
    %c0_11 = arith.constant 0 : index
    %7 = vector.load %arg5[%c0_10, %c0_11] : memref<1x128xf32, #tpu.memory_space<vmem>>, vector<1x128xf32>
    %8 = vector.broadcast %7 : vector<1x128xf32> to vector<32x128xf32>
    %9 = arith.addf %6, %8 : vector<32x128xf32>
    %cst_12 = arith.constant 0.000000e+00 : f32
    %10 = vector.broadcast %cst_12 : f32 to vector<32x128xf32>
    %11 = arith.maximumf %9, %10 : vector<32x128xf32>
    %c0_13 = arith.constant 0 : index
    %c0_14 = arith.constant 0 : index
    %12 = vector.load %arg3[%c0_13, %c0_14] : memref<128x128xf32, #tpu.memory_space<vmem>>, vector<128x128xf32>
    %cst_15 = arith.constant dense<0.000000e+00> : vector<32x128xf32>
    %13 = tpu.matmul %11, %12, %cst_15 {dimension_numbers = #tpu.dot_dimension_numbers<[1], [0], [0], [1], [0, 0, 1, 1], [], []>} : vector<32x128xf32>, vector<128x128xf32>, vector<32x128xf32> -> vector<32x128xf32>
    %c0_16 = arith.constant 0 : index
    %c0_17 = arith.constant 0 : index
    %14 = vector.load %arg6[%c0_16, %c0_17] : memref<1x128xf32, #tpu.memory_space<vmem>>, vector<1x128xf32>
    %15 = vector.broadcast %14 : vector<1x128xf32> to vector<32x128xf32>
    %16 = arith.addf %13, %15 : vector<32x128xf32>
    %cst_18 = arith.constant 0.000000e+00 : f32
    %17 = vector.broadcast %cst_18 : f32 to vector<32x128xf32>
    %18 = arith.maximumf %16, %17 : vector<32x128xf32>
    %c0_19 = arith.constant 0 : index
    %c0_20 = arith.constant 0 : index
    %19 = vector.load %arg4[%c0_19, %c0_20] : memref<128x128xf32, #tpu.memory_space<vmem>>, vector<128x128xf32>
    %cst_21 = arith.constant dense<0.000000e+00> : vector<32x128xf32>
    %20 = tpu.matmul %18, %19, %cst_21 {dimension_numbers = #tpu.dot_dimension_numbers<[1], [0], [0], [1], [0, 0, 1, 1], [], []>} : vector<32x128xf32>, vector<128x128xf32>, vector<32x128xf32> -> vector<32x128xf32>
    %c0_22 = arith.constant 0 : index
    %c0_23 = arith.constant 0 : index
    %21 = vector.load %arg7[%c0_22, %c0_23] : memref<1x128xf32, #tpu.memory_space<vmem>>, vector<1x128xf32>
    %22 = vector.broadcast %21 : vector<1x128xf32> to vector<32x128xf32>
    %23 = arith.addf %20, %22 : vector<32x128xf32>
    %c0_24 = arith.constant 0 : index
    %c0_25 = arith.constant 0 : index
    %24 = vector.load %arg8[%c0_24, %c0_25] : memref<32x128xf32, #tpu.memory_space<vmem>>, vector<32x128xf32>
    tpu.vector_store %arg8[%c0_24, %c0_25], %23 {strides = array<i32>} : memref<32x128xf32, #tpu.memory_space<vmem>>, vector<32x128xf32>,
    return
  }
  func.func @transform_0(%arg0: i32) -> (i32, i32) {
    %c0_i32 = arith.constant 0 : i32
    %c0_i32_0 = arith.constant 0 : i32
    return %arg0, %c0_i32 : i32, i32
  }
  func.func @transform_1(%arg0: i32) -> (i32, i32) {
    %c0_i32 = arith.constant 0 : i32
    %c0_i32_0 = arith.constant 0 : i32
    %c0_i32_1 = arith.constant 0 : i32
    return %c0_i32, %c0_i32_0 : i32, i32
  }
  func.func @transform_2(%arg0: i32) -> (i32, i32) {
    %c0_i32 = arith.constant 0 : i32
    %c0_i32_0 = arith.constant 0 : i32
    %c0_i32_1 = arith.constant 0 : i32
    return %c0_i32, %c0_i32_0 : i32, i32
  }
  func.func @transform_3(%arg0: i32) -> (i32, i32) {
    %c0_i32 = arith.constant 0 : i32
    %c0_i32_0 = arith.constant 0 : i32
    %c0_i32_1 = arith.constant 0 : i32
    return %c0_i32, %c0_i32_0 : i32, i32
  }
  func.func @transform_4(%arg0: i32) -> (i32, i32) {
    %c0_i32 = arith.constant 0 : i32
    %c0_i32_0 = arith.constant 0 : i32
    %c0_i32_1 = arith.constant 0 : i32
    return %c0_i32, %c0_i32_0 : i32, i32
  }
  func.func @transform_5(%arg0: i32) -> (i32, i32) {
    %c0_i32 = arith.constant 0 : i32
    %c0_i32_0 = arith.constant 0 : i32
    %c0_i32_1 = arith.constant 0 : i32
    return %c0_i32, %c0_i32_0 : i32, i32
  }
  func.func @transform_6(%arg0: i32) -> (i32, i32) {
    %c0_i32 = arith.constant 0 : i32
    %c0_i32_0 = arith.constant 0 : i32
    %c0_i32_1 = arith.constant 0 : i32
    return %c0_i32, %c0_i32_0 : i32, i32
  }
  func.func @transform_7(%arg0: i32) -> (i32, i32) {
    %c0_i32 = arith.constant 0 : i32
    %c0_i32_0 = arith.constant 0 : i32
    return %arg0, %c0_i32 : i32, i32
  }
}

module attributes {stable_mosaic.version = 11 : i64} {
  func.func @_dmlp_fused_kernel(%arg0: i32, %arg1: memref<32x4xf32, #tpu.memory_space<vmem>>, %arg2: memref<128x128xf32, #tpu.memory_space<vmem>>, %arg3: memref<128x128xf32, #tpu.memory_space<vmem>>, %arg4: memref<128x128xf32, #tpu.memory_space<vmem>>, %arg5: memref<1x128xf32, #tpu.memory_space<vmem>>, %arg6: memref<1x128xf32, #tpu.memory_space<vmem>>, %arg7: memref<1x128xf32, #tpu.memory_space<vmem>>, %arg8: memref<32x128xf32, #tpu.memory_space<vmem>>, %arg9: memref<32x128xf32, #tpu.memory_space<vmem>>) attributes {dimension_semantics = [#tpu.dimension_semantics<parallel>], iteration_bounds = array<i64: 2>, scalar_prefetch = 0 : i64, scratch_operands = 1 : i64, tpu.core_type = #tpu.core_type<tc>, window_params = [{transform_indices = @transform_0, window_bounds = array<i64: 32, 4>}, {pipeline_mode = #tpu.pipeline_mode<synchronous>, transform_indices = @transform_1, window_bounds = array<i64: 128, 128>}, {pipeline_mode = #tpu.pipeline_mode<synchronous>, transform_indices = @transform_2, window_bounds = array<i64: 128, 128>}, {pipeline_mode = #tpu.pipeline_mode<synchronous>, transform_indices = @transform_3, window_bounds = array<i64: 128, 128>}, {pipeline_mode = #tpu.pipeline_mode<synchronous>, transform_indices = @transform_4, window_bounds = array<i64: 1, 128>}, {pipeline_mode = #tpu.pipeline_mode<synchronous>, transform_indices = @transform_5, window_bounds = array<i64: 1, 128>}, {pipeline_mode = #tpu.pipeline_mode<synchronous>, transform_indices = @transform_6, window_bounds = array<i64: 1, 128>}, {transform_indices = @transform_7, window_bounds = array<i64: 32, 128>}]} {
    %cst = arith.constant 0.000000e+00 : f32
    %0 = vector.broadcast %cst : f32 to vector<32x128xf32>
    %c0 = arith.constant 0 : index
    %c0_0 = arith.constant 0 : index
    %1 = vector.load %arg9[%c0, %c0_0] : memref<32x128xf32, #tpu.memory_space<vmem>>, vector<32x128xf32>
    tpu.vector_store %arg9[%c0, %c0_0], %0 {strides = array<i32>} : memref<32x128xf32, #tpu.memory_space<vmem>>, vector<32x128xf32>,
    %c0_1 = arith.constant 0 : index
    %c0_2 = arith.constant 0 : index
    %2 = vector.load %arg1[%c0_1, %c0_2] : memref<32x4xf32, #tpu.memory_space<vmem>>, vector<32x4xf32>
    %c0_3 = arith.constant 0 : index
    %c0_4 = arith.constant 0 : index
    %3 = vector.load %arg9[%c0_3, %c0_4] : memref<32x128xf32, #tpu.memory_space<vmem>>, vector<32x4xf32>
    tpu.vector_store %arg9[%c0_3, %c0_4], %2 {strides = array<i32>} : memref<32x128xf32, #tpu.memory_space<vmem>>, vector<32x4xf32>,
    %c0_5 = arith.constant 0 : index
    %c0_6 = arith.constant 0 : index
    %4 = vector.load %arg9[%c0_5, %c0_6] : memref<32x128xf32, #tpu.memory_space<vmem>>, vector<32x128xf32>
    %c0_7 = arith.constant 0 : index
    %c0_8 = arith.constant 0 : index
    %5 = vector.load %arg2[%c0_7, %c0_8] : memref<128x128xf32, #tpu.memory_space<vmem>>, vector<128x128xf32>
    %cst_9 = arith.constant dense<0.000000e+00> : vector<32x128xf32>
    %6 = tpu.matmul %4, %5, %cst_9 {dimension_numbers = #tpu.dot_dimension_numbers<[1], [0], [0], [1], [0, 0, 1, 1], [], []>} : vector<32x128xf32>, vector<128x128xf32>, vector<32x128xf32> -> vector<32x128xf32>
    %c0_10 = arith.constant 0 : index
    %c0_11 = arith.constant 0 : index
    %7 = vector.load %arg5[%c0_10, %c0_11] : memref<1x128xf32, #tpu.memory_space<vmem>>, vector<1x128xf32>
    %8 = vector.broadcast %7 : vector<1x128xf32> to vector<32x128xf32>
    %9 = arith.addf %6, %8 : vector<32x128xf32>
    %cst_12 = arith.constant 0.000000e+00 : f32
    %10 = vector.broadcast %cst_12 : f32 to vector<32x128xf32>
    %11 = arith.maximumf %9, %10 : vector<32x128xf32>
    %c0_13 = arith.constant 0 : index
    %c0_14 = arith.constant 0 : index
    %12 = vector.load %arg3[%c0_13, %c0_14] : memref<128x128xf32, #tpu.memory_space<vmem>>, vector<128x128xf32>
    %cst_15 = arith.constant dense<0.000000e+00> : vector<32x128xf32>
    %13 = tpu.matmul %11, %12, %cst_15 {dimension_numbers = #tpu.dot_dimension_numbers<[1], [0], [0], [1], [0, 0, 1, 1], [], []>} : vector<32x128xf32>, vector<128x128xf32>, vector<32x128xf32> -> vector<32x128xf32>
    %c0_16 = arith.constant 0 : index
    %c0_17 = arith.constant 0 : index
    %14 = vector.load %arg6[%c0_16, %c0_17] : memref<1x128xf32, #tpu.memory_space<vmem>>, vector<1x128xf32>
    %15 = vector.broadcast %14 : vector<1x128xf32> to vector<32x128xf32>
    %16 = arith.addf %13, %15 : vector<32x128xf32>
    %cst_18 = arith.constant 0.000000e+00 : f32
    %17 = vector.broadcast %cst_18 : f32 to vector<32x128xf32>
    %18 = arith.maximumf %16, %17 : vector<32x128xf32>
    %c0_19 = arith.constant 0 : index
    %c0_20 = arith.constant 0 : index
    %19 = vector.load %arg4[%c0_19, %c0_20] : memref<128x128xf32, #tpu.memory_space<vmem>>, vector<128x128xf32>
    %cst_21 = arith.constant dense<0.000000e+00> : vector<32x128xf32>
    %20 = tpu.matmul %18, %19, %cst_21 {dimension_numbers = #tpu.dot_dimension_numbers<[1], [0], [0], [1], [0, 0, 1, 1], [], []>} : vector<32x128xf32>, vector<128x128xf32>, vector<32x128xf32> -> vector<32x128xf32>
    %c0_22 = arith.constant 0 : index
    %c0_23 = arith.constant 0 : index
    %21 = vector.load %arg7[%c0_22, %c0_23] : memref<1x128xf32, #tpu.memory_space<vmem>>, vector<1x128xf32>
    %22 = vector.broadcast %21 : vector<1x128xf32> to vector<32x128xf32>
    %23 = arith.addf %20, %22 : vector<32x128xf32>
    %c0_24 = arith.constant 0 : index
    %c0_25 = arith.constant 0 : index
    %24 = vector.load %arg8[%c0_24, %c0_25] : memref<32x128xf32, #tpu.memory_space<vmem>>, vector<32x128xf32>
    tpu.vector_store %arg8[%c0_24, %c0_25], %23 {strides = array<i32>} : memref<32x128xf32, #tpu.memory_space<vmem>>, vector<32x128xf32>,
    return
  }
  func.func @transform_0(%arg0: i32) -> (i32, i32) {
    %c0_i32 = arith.constant 0 : i32
    %c0_i32_0 = arith.constant 0 : i32
    return %arg0, %c0_i32 : i32, i32
  }
  func.func @transform_1(%arg0: i32) -> (i32, i32) {
    %c0_i32 = arith.constant 0 : i32
    %c0_i32_0 = arith.constant 0 : i32
    %c0_i32_1 = arith.constant 0 : i32
    return %c0_i32, %c0_i32_0 : i32, i32
  }
  func.func @transform_2(%arg0: i32) -> (i32, i32) {
    %c0_i32 = arith.constant 0 : i32
    %c0_i32_0 = arith.constant 0 : i32
    %c0_i32_1 = arith.constant 0 : i32
    return %c0_i32, %c0_i32_0 : i32, i32
  }
  func.func @transform_3(%arg0: i32) -> (i32, i32) {
    %c0_i32 = arith.constant 0 : i32
    %c0_i32_0 = arith.constant 0 : i32
    %c0_i32_1 = arith.constant 0 : i32
    return %c0_i32, %c0_i32_0 : i32, i32
  }
  func.func @transform_4(%arg0: i32) -> (i32, i32) {
    %c0_i32 = arith.constant 0 : i32
    %c0_i32_0 = arith.constant 0 : i32
    %c0_i32_1 = arith.constant 0 : i32
    return %c0_i32, %c0_i32_0 : i32, i32
  }
  func.func @transform_5(%arg0: i32) -> (i32, i32) {
    %c0_i32 = arith.constant 0 : i32
    %c0_i32_0 = arith.constant 0 : i32
    %c0_i32_1 = arith.constant 0 : i32
    return %c0_i32, %c0_i32_0 : i32, i32
  }
  func.func @transform_6(%arg0: i32) -> (i32, i32) {
    %c0_i32 = arith.constant 0 : i32
    %c0_i32_0 = arith.constant 0 : i32
    %c0_i32_1 = arith.constant 0 : i32
    return %c0_i32, %c0_i32_0 : i32, i32
  }
  func.func @transform_7(%arg0: i32) -> (i32, i32) {
    %c0_i32 = arith.constant 0 : i32
    %c0_i32_0 = arith.constant 0 : i32
    return %arg0, %c0_i32 : i32, i32
  }
}

</mosaic_0001>

<llo_original>
// kernel: tpu_custom_call.1
$region0: #{tpu_custom_call.1}
  #allocation0 [shape = 'u32[]', space=smem, size = 0x4, offset = 0x4, fixed_abs, tag = 'smem constant byte address 0x4 - core index']
  #allocation1 [shape = 'u32[144,128]{1,0:T(1,128)}', space=vmem, size = 0x12000, scoped, tag = 'internal scratch']
  #allocation2 [shape = 'f32[32,128]{1,0:T(8,128)}', space=vmem, size = 0x4000, scoped, tag = 'scratch operand']
  %s0 = inlined_call_operand.vmem [shape: f32[64,4], index: 0, kind: input, shape index: {}]
  %s1 = inlined_call_operand.hbm [shape: f32[128,128], index: 1, kind: input, shape index: {}]
  %s2 = inlined_call_operand.hbm [shape: f32[128,128], index: 2, kind: input, shape index: {}]
  %s3 = inlined_call_operand.hbm [shape: f32[128,128], index: 3, kind: input, shape index: {}]
  %s4 = inlined_call_operand.vmem [shape: f32[1,128], index: 4, kind: input, shape index: {}]
  %s5 = inlined_call_operand.vmem [shape: f32[1,128], index: 5, kind: input, shape index: {}]
  %s6 = inlined_call_operand.vmem [shape: f32[1,128], index: 6, kind: input, shape index: {}]
  %s7 = inlined_call_operand.hbm [shape: f32[64,128], index: 7, kind: output, shape index: {}]
  %s8 = sld [smem:[#allocation0]]
  $region73: #{tpu_custom_call.1} parent=0
    _
  %s10 = ssub.s32 1, %s8
  %s11 = scalar_select 0, %s10, %s8
  $region1: #{tpu_custom_call.1} parent=0
    #allocation3 [shape = 'u8[65536]{0}', space=vmem, size = 0x10000, scoped, tag = 'input window, operand 1, single buffered']
    #allocation4 [shape = 's32[2]{0}', space=sflag, size = 0x8, scoped, tag = 'scoped memory for tpu_custom_call.1']
    #allocation5 [shape = 's32[2]{0}', space=sflag, size = 0x8, scoped, tag = 'scoped memory for tpu_custom_call.1']
    #allocation6 [shape = 'u8[65536]{0}', space=vmem, size = 0x10000, scoped, tag = 'input window, operand 2, single buffered']
    #allocation7 [shape = 's32[1]{0}', space=sflag, size = 0x4, scoped, tag = 'scoped memory for tpu_custom_call.1']
    #allocation8 [shape = 'u8[65536]{0}', space=vmem, size = 0x10000, scoped, tag = 'input window, operand 3, single buffered']
    #allocation9 [shape = 'u8[32768]{0}', space=vmem, size = 0x8000, scoped, tag = 'output window, operand 0']
    %12 = vsyncpa [#allocation4], 0
    %13 = vsyncpa [#allocation7], 0
    %14 = vsyncpa [#allocation5], 0
    %s15 = scalar_lea.sflag [#allocation5], 1
    %16 = vsyncpa %s15, 0
    loop: start=0, step=1, limit=4
    $region2: #{tpu_custom_call.1} parent=1 // loop_pre_header
      _
    $region3: #{tpu_custom_call.1} parent=1 // loop_header
      %s18 = sphi 0, %s22
      %p19 = scmp.ge.s32.totalorder %s18, 4
      %s28 = sphi 0, %s30
      %s31 = sphi 0, %s28
      %s32 = sphi 0, %s31
      %s48 = sphi 0, %s32
      %s52 = sphi 0, %s52
      %s54 = sphi 0, %s52
      %s55 = sphi 0, %s54
      %s69 = sphi 0, %s55
      %s73 = sphi 0, %s73
      %s75 = sphi 0, %s73
      %s76 = sphi 0, %s75
      %s90 = sphi 0, %s76
      %s94 = sphi 0, %s94
      %s96 = sphi 0, %s94
      %s97 = sphi 0, %s96
      %s111 = sphi 0, %s97
      %s115 = sphi 0, %s115
      %s117 = sphi 0, %s115
      %s118 = sphi 0, %s117
      %s132 = sphi 0, %s118
      %s136 = sphi 0, %s136
      %s138 = sphi 0, %s136
      %s139 = sphi 0, %s138
      %s153 = sphi 0, %s139
      %s157 = sphi 0, %s157
      %s159 = sphi 0, %s157
      %s160 = sphi 0, %s159
      %s174 = sphi 0, %s160
      %s180 = sphi 0, %s182
      %s183 = sphi 0, %s180
      %s184 = sphi 0, %s183
      %s200 = sphi 0, %s184
    $region4: #{tpu_custom_call.1} parent=1 // loop_header_branch
      %21 = sbr.rel (%p19) target = $region8
    $region5: #{tpu_custom_call.1} parent=1 // loop_body
      %s23 = ssub.s32 %s18, 1
      %s24 = ssub.s32 %s18, 2
      %s25 = sadd.s32 %s18, 1
      %s26 = ssub.s32 %s18, %s25
      %p27 = scmp.eq.s32.totalorder %s26, 0
      %s29 = sadd.s32 %s28, 1
      %s30 = scalar_select %p27, %s28, %s29
      %p33 = pneg %p27
      %p34 = scmp.eq.s32.totalorder %s18, 1
      %p35 = por %p33, %p34
      %p36 = scmp.ne.s32.totalorder %s28, %s31
      %p37 = scmp.eq.s32.totalorder %s18, 0
      %p38 = por %p36, %p37
      %p39 = scmp.ne.s32.totalorder %s28, %s31
      %p40 = scmp.eq.s32.totalorder %s23, 1
      %p41 = por %p39, %p40
      %p42 = scmp.ne.s32.totalorder %s31, %s32
      %p43 = scmp.eq.s32.totalorder %s23, 0
      %p44 = por %p42, %p43
      %p45 = scmp.ne.s32.totalorder %s31, %s32
      %p46 = scmp.eq.s32.totalorder %s24, 1
      %p47 = por %p45, %p46
      %p49 = scmp.ne.s32.totalorder %s32, %s48
      %p50 = scmp.eq.s32.totalorder %s24, 0
      %p51 = por %p49, %p50
      %s53 = sadd.s32 %s52, 1
      %p56 = scmp.eq.s32.totalorder %s18, 1
      %p57 = scmp.ne.s32.totalorder %s52, %s54
      %p58 = scmp.eq.s32.totalorder %s18, 0
      %p59 = por %p57, %p58
      %p60 = scmp.ne.s32.totalorder %s52, %s54
      %p61 = scmp.eq.s32.totalorder %s23, 1
      %p62 = por %p60, %p61
      %p63 = scmp.ne.s32.totalorder %s54, %s55
      %p64 = scmp.eq.s32.totalorder %s23, 0
      %p65 = por %p63, %p64
      %p66 = scmp.ne.s32.totalorder %s54, %s55
      %p67 = scmp.eq.s32.totalorder %s24, 1
      %p68 = por %p66, %p67
      %p70 = scmp.ne.s32.totalorder %s55, %s69
      %p71 = scmp.eq.s32.totalorder %s24, 0
      %p72 = por %p70, %p71
      %s74 = sadd.s32 %s73, 1
      %p77 = scmp.eq.s32.totalorder %s18, 1
      %p78 = scmp.ne.s32.totalorder %s73, %s75
      %p79 = scmp.eq.s32.totalorder %s18, 0
      %p80 = por %p78, %p79
      %p81 = scmp.ne.s32.totalorder %s73, %s75
      %p82 = scmp.eq.s32.totalorder %s23, 1
      %p83 = por %p81, %p82
      %p84 = scmp.ne.s32.totalorder %s75, %s76
      %p85 = scmp.eq.s32.totalorder %s23, 0
      %p86 = por %p84, %p85
      %p87 = scmp.ne.s32.totalorder %s75, %s76
      %p88 = scmp.eq.s32.totalorder %s24, 1
      %p89 = por %p87, %p88
      %p91 = scmp.ne.s32.totalorder %s76, %s90
      %p92 = scmp.eq.s32.totalorder %s24, 0
      %p93 = por %p91, %p92
      %s95 = sadd.s32 %s94, 1
      %p98 = scmp.eq.s32.totalorder %s18, 1
      %p99 = scmp.ne.s32.totalorder %s94, %s96
      %p100 = scmp.eq.s32.totalorder %s18, 0
      %p101 = por %p99, %p100
      %p102 = scmp.ne.s32.totalorder %s94, %s96
      %p103 = scmp.eq.s32.totalorder %s23, 1
      %p104 = por %p102, %p103
      %p105 = scmp.ne.s32.totalorder %s96, %s97
      %p106 = scmp.eq.s32.totalorder %s23, 0
      %p107 = por %p105, %p106
      %p108 = scmp.ne.s32.totalorder %s96, %s97
      %p109 = scmp.eq.s32.totalorder %s24, 1
      %p110 = por %p108, %p109
      %p112 = scmp.ne.s32.totalorder %s97, %s111
      %p113 = scmp.eq.s32.totalorder %s24, 0
      %p114 = por %p112, %p113
      %s116 = sadd.s32 %s115, 1
      %p119 = scmp.eq.s32.totalorder %s18, 1
      %p120 = scmp.ne.s32.totalorder %s115, %s117
      %p121 = scmp.eq.s32.totalorder %s18, 0
      %p122 = por %p120, %p121
      %p123 = scmp.ne.s32.totalorder %s115, %s117
      %p124 = scmp.eq.s32.totalorder %s23, 1
      %p125 = por %p123, %p124
      %p126 = scmp.ne.s32.totalorder %s117, %s118
      %p127 = scmp.eq.s32.totalorder %s23, 0
      %p128 = por %p126, %p127
      %p129 = scmp.ne.s32.totalorder %s117, %s118
      %p130 = scmp.eq.s32.totalorder %s24, 1
      %p131 = por %p129, %p130
      %p133 = scmp.ne.s32.totalorder %s118, %s132
      %p134 = scmp.eq.s32.totalorder %s24, 0
      %p135 = por %p133, %p134
      %s137 = sadd.s32 %s136, 1
      %p140 = scmp.eq.s32.totalorder %s18, 1
      %p141 = scmp.ne.s32.totalorder %s136, %s138
      %p142 = scmp.eq.s32.totalorder %s18, 0
      %p143 = por %p141, %p142
      %p144 = scmp.ne.s32.totalorder %s136, %s138
      %p145 = scmp.eq.s32.totalorder %s23, 1
      %p146 = por %p144, %p145
      %p147 = scmp.ne.s32.totalorder %s138, %s139
      %p148 = scmp.eq.s32.totalorder %s23, 0
      %p149 = por %p147, %p148
      %p150 = scmp.ne.s32.totalorder %s138, %s139
      %p151 = scmp.eq.s32.totalorder %s24, 1
      %p152 = por %p150, %p151
      %p154 = scmp.ne.s32.totalorder %s139, %s153
      %p155 = scmp.eq.s32.totalorder %s24, 0
      %p156 = por %p154, %p155
      %s158 = sadd.s32 %s157, 1
      %p161 = scmp.eq.s32.totalorder %s18, 1
      %p162 = scmp.ne.s32.totalorder %s157, %s159
      %p163 = scmp.eq.s32.totalorder %s18, 0
      %p164 = por %p162, %p163
      %p165 = scmp.ne.s32.totalorder %s157, %s159
      %p166 = scmp.eq.s32.totalorder %s23, 1
      %p167 = por %p165, %p166
      %p168 = scmp.ne.s32.totalorder %s159, %s160
      %p169 = scmp.eq.s32.totalorder %s23, 0
      %p170 = por %p168, %p169
      %p171 = scmp.ne.s32.totalorder %s159, %s160
      %p172 = scmp.eq.s32.totalorder %s24, 1
      %p173 = por %p171, %p172
      %p175 = scmp.ne.s32.totalorder %s160, %s174
      %p176 = scmp.eq.s32.totalorder %s24, 0
      %p177 = por %p175, %p176
      %s178 = ssub.s32 %s18, %s25
      %p179 = scmp.eq.s32.totalorder %s178, 0
      %s181 = sadd.s32 %s180, 1
      %s182 = scalar_select %p179, %s180, %s181
      %p185 = pneg %p179
      %p186 = scmp.eq.s32.totalorder %s18, 1
      %p187 = por %p185, %p186
      %p188 = scmp.ne.s32.totalorder %s180, %s183
      %p189 = scmp.eq.s32.totalorder %s18, 0
      %p190 = por %p188, %p189
      %p191 = scmp.ne.s32.totalorder %s180, %s183
      %p192 = scmp.eq.s32.totalorder %s23, 1
      %p193 = por %p191, %p192
      %p194 = scmp.ne.s32.totalorder %s183, %s184
      %p195 = scmp.eq.s32.totalorder %s23, 0
      %p196 = por %p194, %p195
      %p197 = scmp.ne.s32.totalorder %s183, %s184
      %p198 = scmp.eq.s32.totalorder %s24, 1
      %p199 = por %p197, %p198
      %p201 = scmp.ne.s32.totalorder %s184, %s200
      %p202 = scmp.eq.s32.totalorder %s24, 0
      %p203 = por %p201, %p202
      %p204 = scmp.le.s32.totalorder 1, %s18
      %p205 = scmp.lt.s32.totalorder %s18, 3
      %p206 = pnand %p204, %p205
      %p207 = pneg %p206
      // Predicated region
      $region9: #{tpu_custom_call.1} parent=5 // pred_check
        _
      $region10: #{tpu_custom_call.1} parent=5 // pred_check_branch
        %209 = sbr.rel (%p206) target = $region12
      $region11: #{tpu_custom_call.1} parent=5 // pred_region
        %s210 = ssub.s32 %s18, 1
        // Predicated region
        $region13: #{tpu_custom_call.1} parent=11 // pred_check
          %p211 = pneg %p65
        $region14: #{tpu_custom_call.1} parent=11 // pred_check_branch
          %213 = sbr.rel (%p211) target = $region16
        $region15: #{tpu_custom_call.1} parent=11 // pred_region
          %s215 = ssub.s32 2048, 2048
          %216 = vsyncadd [#allocation4], %s215
          %s217 = sshll.u32 [#allocation3], 4
          %s218 = int_to_ptr.vmem [resolvable:$true] %s217
          %223 = dma.hbm_to_vmem [thread:$0]  %s1, 2048, %s218, [#allocation4], 128, 128, 8
        $region16: #{tpu_custom_call.1} parent=11 // pred_fallthru
          _
        // Predicated region
        $region17: #{tpu_custom_call.1} parent=11 // pred_check
          %p224 = pneg %p86
        $region18: #{tpu_custom_call.1} parent=11 // pred_check_branch
          %226 = sbr.rel (%p224) target = $region20
        $region19: #{tpu_custom_call.1} parent=11 // pred_region
          %s228 = ssub.s32 2048, 2048
          %229 = vsyncadd [#allocation7], %s228
          %s230 = sshll.u32 [#allocation6], 4
          %s231 = int_to_ptr.vmem [resolvable:$true] %s230
          %236 = dma.hbm_to_vmem [thread:$0]  %s2, 2048, %s231, [#allocation7], 128, 128, 8
        $region20: #{tpu_custom_call.1} parent=11 // pred_fallthru
          _
        // Predicated region
        $region21: #{tpu_custom_call.1} parent=11 // pred_check
          %p237 = pneg %p107
        $region22: #{tpu_custom_call.1} parent=11 // pred_check_branch
          %239 = sbr.rel (%p237) target = $region24
        $region23: #{tpu_custom_call.1} parent=11 // pred_region
          %s241 = ssub.s32 2048, 2048
          %242 = vsyncadd [#allocation7], %s241
          %s243 = sshll.u32 [#allocation8], 4
          %s244 = int_to_ptr.vmem [resolvable:$true] %s243
          %249 = dma.hbm_to_vmem [thread:$0]  %s3, 2048, %s244, [#allocation7], 128, 128, 8
        $region24: #{tpu_custom_call.1} parent=11 // pred_fallthru
          _
        // Predicated region
        $region25: #{tpu_custom_call.1} parent=11 // pred_check
          %p250 = pneg %p128
        $region26: #{tpu_custom_call.1} parent=11 // pred_check_branch
          %252 = sbr.rel (%p250) target = $region28
        $region27: #{tpu_custom_call.1} parent=11 // pred_region
          _
        $region28: #{tpu_custom_call.1} parent=11 // pred_fallthru
          _
        // Predicated region
        $region29: #{tpu_custom_call.1} parent=11 // pred_check
          %p253 = pneg %p149
        $region30: #{tpu_custom_call.1} parent=11 // pred_check_branch
          %255 = sbr.rel (%p253) target = $region32
        $region31: #{tpu_custom_call.1} parent=11 // pred_region
          _
        $region32: #{tpu_custom_call.1} parent=11 // pred_fallthru
          _
        // Predicated region
        $region33: #{tpu_custom_call.1} parent=11 // pred_check
          %p256 = pneg %p170
        $region34: #{tpu_custom_call.1} parent=11 // pred_check_branch
          %258 = sbr.rel (%p256) target = $region36
        $region35: #{tpu_custom_call.1} parent=11 // pred_region
          _
        $region36: #{tpu_custom_call.1} parent=11 // pred_fallthru
          _
      $region12: #{tpu_custom_call.1} parent=5 // pred_fallthru
        _
      %p259 = scmp.lt.s32.totalorder %s18, 2
      // Predicated region
      $region37: #{tpu_custom_call.1} parent=5 // pred_check
        %p260 = pneg %p259
      $region38: #{tpu_custom_call.1} parent=5 // pred_check_branch
        %262 = sbr.rel (%p260) target = $region40
      $region39: #{tpu_custom_call.1} parent=5 // pred_region
        // Predicated region
        $region41: #{tpu_custom_call.1} parent=39 // pred_check
          %p263 = pneg %p38
        $region42: #{tpu_custom_call.1} parent=39 // pred_check_branch
          %265 = sbr.rel (%p263) target = $region44
        $region43: #{tpu_custom_call.1} parent=39 // pred_region
          %s266 = smul.u32 4, %s18
          %p267 = scmp.lt.s32.totalorder %s266, 7
          %s268 = scalar_select %p267, %s266, 7
          %s269 = smul.addr %s268, 8
          %s270 = scalar_lea.vmem %s0, %s269
          %s271 = smul.u32 4, %s18
        $region44: #{tpu_custom_call.1} parent=39 // pred_fallthru
          _
      $region40: #{tpu_custom_call.1} parent=5 // pred_fallthru
        _
      %p272 = scmp.le.s32.totalorder 1, %s18
      %p273 = scmp.lt.s32.totalorder %s18, 3
      %p274 = pnand %p272, %p273
      %p275 = pneg %p274
      // Predicated region
      $region45: #{tpu_custom_call.1} parent=5 // pred_check
        _
      $region46: #{tpu_custom_call.1} parent=5 // pred_check_branch
        %277 = sbr.rel (%p274) target = $region48
      $region47: #{tpu_custom_call.1} parent=5 // pred_region
        %s278 = ssub.s32 %s18, 1
        // Predicated region
        $region49: #{tpu_custom_call.1} parent=47 // pred_check
          %p279 = pneg %p65
        $region50: #{tpu_custom_call.1} parent=47 // pred_check_branch
          %281 = sbr.rel (%p279) target = $region52
        $region51: #{tpu_custom_call.1} parent=47 // pred_region
          %282 = dma.done [#allocation4], 2048
        $region52: #{tpu_custom_call.1} parent=47 // pred_fallthru
          _
        // Predicated region
        $region53: #{tpu_custom_call.1} parent=47 // pred_check
          %p283 = pneg %p86
        $region54: #{tpu_custom_call.1} parent=47 // pred_check_branch
          %285 = sbr.rel (%p283) target = $region56
        $region55: #{tpu_custom_call.1} parent=47 // pred_region
          %286 = dma.done [#allocation7], 2048
        $region56: #{tpu_custom_call.1} parent=47 // pred_fallthru
          _
        // Predicated region
        $region57: #{tpu_custom_call.1} parent=47 // pred_check
          %p287 = pneg %p107
        $region58: #{tpu_custom_call.1} parent=47 // pred_check_branch
          %289 = sbr.rel (%p287) target = $region60
        $region59: #{tpu_custom_call.1} parent=47 // pred_region
          %290 = dma.done [#allocation7], 2048
        $region60: #{tpu_custom_call.1} parent=47 // pred_fallthru
          _
        %s291 = smul.u32 4, %s23
        %p292 = scmp.lt.s32.totalorder %s291, 7
        %s293 = scalar_select %p292, %s291, 7
        %s294 = smul.addr %s293, 8
        %s295 = scalar_lea.vmem %s0, %s294
        %p296 = pneg %p44
        %p297 = pneg %p41
        %p298 = pneg %p65
        %p299 = pneg %p62
        %p300 = pneg %p86
        %p301 = pneg %p83
        %p302 = pneg %p107
        %p303 = pneg %p104
        %p304 = pneg %p128
        %p305 = pneg %p125
        %p306 = pneg %p149
        %p307 = pneg %p146
        %p308 = pneg %p170
        %p309 = pneg %p167
        %p310 = pneg %p196
        %p311 = pneg %p193
        %s312 = sand.u32 %s183, 1
        %s313 = scalar_lea.sflag [#allocation5], %s312
        %s314 = sand.u32 %s183, 1
        %s315 = smul.addr %s314, 32
        %s316 = scalar_lea.vmem [#allocation9], %s315
        %s317 = smul.u32 4, %s23
        %p318 = scmp.lt.s32.totalorder %s317, 7
        %s319 = scalar_select %p318, %s317, 7
        %s320 = smul.addr %s319, 8
        %s321 = scalar_lea.vmem %s0, %s320
        %s322 = smul.u32 4, %s23
        %s323 = smul.u32 4, %s23
        %324 = vst [vmem:[#allocation2] sm:$0xff] 0.0
        %325 = vst [vmem:[#allocation2 + $0x8] sm:$0xff] 0.0
        %326 = vst [vmem:[#allocation2 + $0x10] sm:$0xff] 0.0
        %327 = vst [vmem:[#allocation2 + $0x18] sm:$0xff] 0.0
        %v328 = vld [vmem:[%s321] sm:$0xff]
        %v329 = vld [vmem:[%s321 + $0x8] sm:$0xff]
        %v330 = vld [vmem:[%s321 + $0x10] sm:$0xff]
        %v331 = vld [vmem:[%s321 + $0x18] sm:$0xff]
        %vm332 = vcmask 31744
        %333 = vst.msk [vmem:[#allocation2] sm:$0xff] %vm332, %v328
        %334 = vst.msk [vmem:[#allocation2 + $0x8] sm:$0xff] %vm332, %v329
        %335 = vst.msk [vmem:[#allocation2 + $0x10] sm:$0xff] %vm332, %v330
        %336 = vst.msk [vmem:[#allocation2 + $0x18] sm:$0xff] %vm332, %v331
        %v337 = vld [vmem:[#allocation2] sm:$0xff]
        %v338 = vld [vmem:[#allocation2 + $0x8] sm:$0xff]
        %v339 = vld [vmem:[#allocation2 + $0x10] sm:$0xff]
        %v340 = vld [vmem:[#allocation2 + $0x18] sm:$0xff]
        %v341 = vld [vmem:[#allocation3] sm:$0xff]
        %v342 = vld [vmem:[#allocation3 + $0x8] sm:$0xff]
        %v343 = vld [vmem:[#allocation3 + $0x10] sm:$0xff]
        %v344 = vld [vmem:[#allocation3 + $0x18] sm:$0xff]
        %v345 = vld [vmem:[#allocation3 + $0x20] sm:$0xff]
        %v346 = vld [vmem:[#allocation3 + $0x28] sm:$0xff]
        %v347 = vld [vmem:[#allocation3 + $0x30] sm:$0xff]
        %v348 = vld [vmem:[#allocation3 + $0x38] sm:$0xff]
        %v349 = vld [vmem:[#allocation3 + $0x40] sm:$0xff]
        %v350 = vld [vmem:[#allocation3 + $0x48] sm:$0xff]
        %v351 = vld [vmem:[#allocation3 + $0x50] sm:$0xff]
        %v352 = vld [vmem:[#allocation3 + $0x58] sm:$0xff]
        %v353 = vld [vmem:[#allocation3 + $0x60] sm:$0xff]
        %v354 = vld [vmem:[#allocation3 + $0x68] sm:$0xff]
        %v355 = vld [vmem:[#allocation3 + $0x70] sm:$0xff]
        %v356 = vld [vmem:[#allocation3 + $0x78] sm:$0xff]
        %v357 = vld [vmem:[%s4] sm:$0x1]
        %v359 = vlaneseq
        %v360 = vshrl.u32 %v359, 7
        %v361 = vsub.s32 0, %v360
        %v362 = vrot.slane %v357, %v361
        %364 = vmatprep.subr.mxu0 0.0
        %365 = vmatpush1.msra.mxu0 %v341
        %366 = vmatprep.subr.mxu0 0.0
        %367 = vmatpush1.msra.mxu0 %v342
        %368 = vmatprep.subr.mxu0 0.0
        %369 = vmatpush1.msra.mxu0 %v343
        %370 = vmatprep.subr.mxu0 0.0
        %371 = vmatpush1.msra.mxu0 %v344
        %372 = vmatprep.subr.mxu0 0.0
        %373 = vmatpush1.msra.mxu0 %v345
        %374 = vmatprep.subr.mxu0 0.0
        %375 = vmatpush1.msra.mxu0 %v346
        %376 = vmatprep.subr.mxu0 0.0
        %377 = vmatpush1.msra.mxu0 %v347
        %378 = vmatprep.subr.mxu0 0.0
        %379 = vmatpush1.msra.mxu0 %v348
        %380 = vmatprep.subr.mxu0 0.0
        %381 = vmatpush1.msra.mxu0 %v349
        %382 = vmatprep.subr.mxu0 0.0
        %383 = vmatpush1.msra.mxu0 %v350
        %384 = vmatprep.subr.mxu0 0.0
        %385 = vmatpush1.msra.mxu0 %v351
        %386 = vmatprep.subr.mxu0 0.0
        %387 = vmatpush1.msra.mxu0 %v352
        %388 = vmatprep.subr.mxu0 0.0
        %389 = vmatpush1.msra.mxu0 %v353
        %390 = vmatprep.subr.mxu0 0.0
        %391 = vmatpush1.msra.mxu0 %v354
        %392 = vmatprep.subr.mxu0 0.0
        %393 = vmatpush1.msra.mxu0 %v355
        %394 = vmatprep.subr.mxu0 0.0
        %395 = vmatpush1.msra.mxu0 %v356
        %396 = vmatprep.subr.mxu0 0.0
        %397 = vmatpush1.msra.mxu0 0.0
        %398 = vmatprep.subr.mxu0 0.0
        %399 = vmatpush1.msra.mxu0 0.0
        %400 = vmatprep.subr.mxu0 0.0
        %401 = vmatpush1.msra.mxu0 0.0
        %402 = vmatprep.subr.mxu0 0.0
        %403 = vmatpush1.msra.mxu0 0.0
        %404 = vmatprep.subr.mxu0 0.0
        %405 = vmatpush1.msra.mxu0 0.0
        %406 = vmatprep.subr.mxu0 0.0
        %407 = vmatpush1.msra.mxu0 0.0
        %408 = vmatprep.subr.mxu0 0.0
        %409 = vmatpush1.msra.mxu0 0.0
        %410 = vmatprep.subr.mxu0 0.0
        %411 = vmatpush1.msra.mxu0 0.0
        %412 = vmatprep.subr.mxu0 0.0
        %413 = vmatpush1.msra.mxu0 0.0
        %414 = vmatprep.subr.mxu0 0.0
        %415 = vmatpush1.msra.mxu0 0.0
        %416 = vmatprep.subr.mxu0 0.0
        %417 = vmatpush1.msra.mxu0 0.0
        %418 = vmatprep.subr.mxu0 0.0
        %419 = vmatpush1.msra.mxu0 0.0
        %420 = vmatprep.subr.mxu0 0.0
        %421 = vmatpush1.msra.mxu0 0.0
        %422 = vmatprep.subr.mxu0 0.0
        %423 = vmatpush1.msra.mxu0 0.0
        %424 = vmatprep.subr.mxu0 0.0
        %425 = vmatpush1.msra.mxu0 0.0
        %426 = vmatprep.subr.mxu0 0.0
        %427 = vmatpush1.msra.mxu0 0.0
        %428 = vmatprep.mubr.f32.mxu0 0.0
        %429 = vmatmul.mubr.f32.gmra.mrb[0].mxu0 %v337
        %v430 = vpop.f32.mrb[0].mxu0
        %v431 = vadd.f32 %v362, %v430
        %v432 = vpop.f32.mrb[0].mxu0
        %433 = vmatprep.mubr.f32.mxu0 0.0
        %434 = vmatmul.mubr.f32.gmra.mrb[0].mxu0 %v338
        %v435 = vpop.f32.mrb[0].mxu0
        %v436 = vadd.f32 %v362, %v435
        %v437 = vpop.f32.mrb[0].mxu0
        %438 = vmatprep.mubr.f32.mxu0 0.0
        %439 = vmatmul.mubr.f32.gmra.mrb[0].mxu0 %v339
        %v440 = vpop.f32.mrb[0].mxu0
        %v441 = vadd.f32 %v362, %v440
        %v442 = vpop.f32.mrb[0].mxu0
        %443 = vmatprep.mubr.f32.mxu0 0.0
        %444 = vmatmul.mubr.f32.gmra.mrb[0].mxu0 %v340
        %v445 = vpop.f32.mrb[0].mxu0
        %v446 = vadd.f32 %v362, %v445
        %v447 = vpop.f32.mrb[0].mxu0
        %448 = vdwg.mxu0
        %v449 = vmax.f32 %v431, 0.0
        %v450 = vmax.f32 %v436, 0.0
        %v451 = vmax.f32 %v441, 0.0
        %v452 = vmax.f32 %v446, 0.0
        %v453 = vld [vmem:[#allocation6] sm:$0xff]
        %v454 = vld [vmem:[#allocation6 + $0x8] sm:$0xff]
        %v455 = vld [vmem:[#allocation6 + $0x10] sm:$0xff]
        %v456 = vld [vmem:[#allocation6 + $0x18] sm:$0xff]
        %v457 = vld [vmem:[#allocation6 + $0x20] sm:$0xff]
        %v458 = vld [vmem:[#allocation6 + $0x28] sm:$0xff]
        %v459 = vld [vmem:[#allocation6 + $0x30] sm:$0xff]
        %v460 = vld [vmem:[#allocation6 + $0x38] sm:$0xff]
        %v461 = vld [vmem:[#allocation6 + $0x40] sm:$0xff]
        %v462 = vld [vmem:[#allocation6 + $0x48] sm:$0xff]
        %v463 = vld [vmem:[#allocation6 + $0x50] sm:$0xff]
        %v464 = vld [vmem:[#allocation6 + $0x58] sm:$0xff]
        %v465 = vld [vmem:[#allocation6 + $0x60] sm:$0xff]
        %v466 = vld [vmem:[#allocation6 + $0x68] sm:$0xff]
        %v467 = vld [vmem:[#allocation6 + $0x70] sm:$0xff]
        %v468 = vld [vmem:[#allocation6 + $0x78] sm:$0xff]
        %v469 = vld [vmem:[%s5] sm:$0x1]
        %v471 = vlaneseq
        %v472 = vshrl.u32 %v471, 7
        %v473 = vsub.s32 0, %v472
        %v474 = vrot.slane %v469, %v473
        %476 = vmatprep.subr.mxu0 0.0
        %477 = vmatpush1.msra.mxu0 %v453
        %478 = vmatprep.subr.mxu0 0.0
        %479 = vmatpush1.msra.mxu0 %v454
        %480 = vmatprep.subr.mxu0 0.0
        %481 = vmatpush1.msra.mxu0 %v455
        %482 = vmatprep.subr.mxu0 0.0
        %483 = vmatpush1.msra.mxu0 %v456
        %484 = vmatprep.subr.mxu0 0.0
        %485 = vmatpush1.msra.mxu0 %v457
        %486 = vmatprep.subr.mxu0 0.0
        %487 = vmatpush1.msra.mxu0 %v458
        %488 = vmatprep.subr.mxu0 0.0
        %489 = vmatpush1.msra.mxu0 %v459
        %490 = vmatprep.subr.mxu0 0.0
        %491 = vmatpush1.msra.mxu0 %v460
        %492 = vmatprep.subr.mxu0 0.0
        %493 = vmatpush1.msra.mxu0 %v461
        %494 = vmatprep.subr.mxu0 0.0
        %495 = vmatpush1.msra.mxu0 %v462
        %496 = vmatprep.subr.mxu0 0.0
        %497 = vmatpush1.msra.mxu0 %v463
        %498 = vmatprep.subr.mxu0 0.0
        %499 = vmatpush1.msra.mxu0 %v464
        %500 = vmatprep.subr.mxu0 0.0
        %501 = vmatpush1.msra.mxu0 %v465
        %502 = vmatprep.subr.mxu0 0.0
        %503 = vmatpush1.msra.mxu0 %v466
        %504 = vmatprep.subr.mxu0 0.0
        %505 = vmatpush1.msra.mxu0 %v467
        %506 = vmatprep.subr.mxu0 0.0
        %507 = vmatpush1.msra.mxu0 %v468
        %508 = vmatprep.subr.mxu0 0.0
        %509 = vmatpush1.msra.mxu0 0.0
        %510 = vmatprep.subr.mxu0 0.0
        %511 = vmatpush1.msra.mxu0 0.0
        %512 = vmatprep.subr.mxu0 0.0
        %513 = vmatpush1.msra.mxu0 0.0
        %514 = vmatprep.subr.mxu0 0.0
        %515 = vmatpush1.msra.mxu0 0.0
        %516 = vmatprep.subr.mxu0 0.0
        %517 = vmatpush1.msra.mxu0 0.0
        %518 = vmatprep.subr.mxu0 0.0
        %519 = vmatpush1.msra.mxu0 0.0
        %520 = vmatprep.subr.mxu0 0.0
        %521 = vmatpush1.msra.mxu0 0.0
        %522 = vmatprep.subr.mxu0 0.0
        %523 = vmatpush1.msra.mxu0 0.0
        %524 = vmatprep.subr.mxu0 0.0
        %525 = vmatpush1.msra.mxu0 0.0
        %526 = vmatprep.subr.mxu0 0.0
        %527 = vmatpush1.msra.mxu0 0.0
        %528 = vmatprep.subr.mxu0 0.0
        %529 = vmatpush1.msra.mxu0 0.0
        %530 = vmatprep.subr.mxu0 0.0
        %531 = vmatpush1.msra.mxu0 0.0
        %532 = vmatprep.subr.mxu0 0.0
        %533 = vmatpush1.msra.mxu0 0.0
        %534 = vmatprep.subr.mxu0 0.0
        %535 = vmatpush1.msra.mxu0 0.0
        %536 = vmatprep.subr.mxu0 0.0
        %537 = vmatpush1.msra.mxu0 0.0
        %538 = vmatprep.subr.mxu0 0.0
        %539 = vmatpush1.msra.mxu0 0.0
        %540 = vmatprep.mubr.f32.mxu0 0.0
        %541 = vmatmul.mubr.f32.gmra.mrb[0].mxu0 %v449
        %v542 = vpop.f32.mrb[0].mxu0
        %v543 = vadd.f32 %v474, %v542
        %v544 = vpop.f32.mrb[0].mxu0
        %545 = vmatprep.mubr.f32.mxu0 0.0
        %546 = vmatmul.mubr.f32.gmra.mrb[0].mxu0 %v450
        %v547 = vpop.f32.mrb[0].mxu0
        %v548 = vadd.f32 %v474, %v547
        %v549 = vpop.f32.mrb[0].mxu0
        %550 = vmatprep.mubr.f32.mxu0 0.0
        %551 = vmatmul.mubr.f32.gmra.mrb[0].mxu0 %v451
        %v552 = vpop.f32.mrb[0].mxu0
        %v553 = vadd.f32 %v474, %v552
        %v554 = vpop.f32.mrb[0].mxu0
        %555 = vmatprep.mubr.f32.mxu0 0.0
        %556 = vmatmul.mubr.f32.gmra.mrb[0].mxu0 %v452
        %v557 = vpop.f32.mrb[0].mxu0
        %v558 = vadd.f32 %v474, %v557
        %v559 = vpop.f32.mrb[0].mxu0
        %560 = vdwg.mxu0
        %v561 = vmax.f32 %v543, 0.0
        %v562 = vmax.f32 %v548, 0.0
        %v563 = vmax.f32 %v553, 0.0
        %v564 = vmax.f32 %v558, 0.0
        %v565 = vld [vmem:[#allocation8] sm:$0xff]
        %v566 = vld [vmem:[#allocation8 + $0x8] sm:$0xff]
        %v567 = vld [vmem:[#allocation8 + $0x10] sm:$0xff]
        %v568 = vld [vmem:[#allocation8 + $0x18] sm:$0xff]
        %v569 = vld [vmem:[#allocation8 + $0x20] sm:$0xff]
        %v570 = vld [vmem:[#allocation8 + $0x28] sm:$0xff]
        %v571 = vld [vmem:[#allocation8 + $0x30] sm:$0xff]
        %v572 = vld [vmem:[#allocation8 + $0x38] sm:$0xff]
        %v573 = vld [vmem:[#allocation8 + $0x40] sm:$0xff]
        %v574 = vld [vmem:[#allocation8 + $0x48] sm:$0xff]
        %v575 = vld [vmem:[#allocation8 + $0x50] sm:$0xff]
        %v576 = vld [vmem:[#allocation8 + $0x58] sm:$0xff]
        %v577 = vld [vmem:[#allocation8 + $0x60] sm:$0xff]
        %v578 = vld [vmem:[#allocation8 + $0x68] sm:$0xff]
        %v579 = vld [vmem:[#allocation8 + $0x70] sm:$0xff]
        %v580 = vld [vmem:[#allocation8 + $0x78] sm:$0xff]
        %v581 = vld [vmem:[%s6] sm:$0x1]
        %v583 = vlaneseq
        %v584 = vshrl.u32 %v583, 7
        %v585 = vsub.s32 0, %v584
        %v586 = vrot.slane %v581, %v585
        %588 = vmatprep.subr.mxu0 0.0
        %589 = vmatpush1.msra.mxu0 %v565
        %590 = vmatprep.subr.mxu0 0.0
        %591 = vmatpush1.msra.mxu0 %v566
        %592 = vmatprep.subr.mxu0 0.0
        %593 = vmatpush1.msra.mxu0 %v567
        %594 = vmatprep.subr.mxu0 0.0
        %595 = vmatpush1.msra.mxu0 %v568
        %596 = vmatprep.subr.mxu0 0.0
        %597 = vmatpush1.msra.mxu0 %v569
        %598 = vmatprep.subr.mxu0 0.0
        %599 = vmatpush1.msra.mxu0 %v570
        %600 = vmatprep.subr.mxu0 0.0
        %601 = vmatpush1.msra.mxu0 %v571
        %602 = vmatprep.subr.mxu0 0.0
        %603 = vmatpush1.msra.mxu0 %v572
        %604 = vmatprep.subr.mxu0 0.0
        %605 = vmatpush1.msra.mxu0 %v573
        %606 = vmatprep.subr.mxu0 0.0
        %607 = vmatpush1.msra.mxu0 %v574
        %608 = vmatprep.subr.mxu0 0.0
        %609 = vmatpush1.msra.mxu0 %v575
        %610 = vmatprep.subr.mxu0 0.0
        %611 = vmatpush1.msra.mxu0 %v576
        %612 = vmatprep.subr.mxu0 0.0
        %613 = vmatpush1.msra.mxu0 %v577
        %614 = vmatprep.subr.mxu0 0.0
        %615 = vmatpush1.msra.mxu0 %v578
        %616 = vmatprep.subr.mxu0 0.0
        %617 = vmatpush1.msra.mxu0 %v579
        %618 = vmatprep.subr.mxu0 0.0
        %619 = vmatpush1.msra.mxu0 %v580
        %620 = vmatprep.subr.mxu0 0.0
        %621 = vmatpush1.msra.mxu0 0.0
        %622 = vmatprep.subr.mxu0 0.0
        %623 = vmatpush1.msra.mxu0 0.0
        %624 = vmatprep.subr.mxu0 0.0
        %625 = vmatpush1.msra.mxu0 0.0
        %626 = vmatprep.subr.mxu0 0.0
        %627 = vmatpush1.msra.mxu0 0.0
        %628 = vmatprep.subr.mxu0 0.0
        %629 = vmatpush1.msra.mxu0 0.0
        %630 = vmatprep.subr.mxu0 0.0
        %631 = vmatpush1.msra.mxu0 0.0
        %632 = vmatprep.subr.mxu0 0.0
        %633 = vmatpush1.msra.mxu0 0.0
        %634 = vmatprep.subr.mxu0 0.0
        %635 = vmatpush1.msra.mxu0 0.0
        %636 = vmatprep.subr.mxu0 0.0
        %637 = vmatpush1.msra.mxu0 0.0
        %638 = vmatprep.subr.mxu0 0.0
        %639 = vmatpush1.msra.mxu0 0.0
        %640 = vmatprep.subr.mxu0 0.0
        %641 = vmatpush1.msra.mxu0 0.0
        %642 = vmatprep.subr.mxu0 0.0
        %643 = vmatpush1.msra.mxu0 0.0
        %644 = vmatprep.subr.mxu0 0.0
        %645 = vmatpush1.msra.mxu0 0.0
        %646 = vmatprep.subr.mxu0 0.0
        %647 = vmatpush1.msra.mxu0 0.0
        %648 = vmatprep.subr.mxu0 0.0
        %649 = vmatpush1.msra.mxu0 0.0
        %650 = vmatprep.subr.mxu0 0.0
        %651 = vmatpush1.msra.mxu0 0.0
        %652 = vmatprep.mubr.f32.mxu0 0.0
        %653 = vmatmul.mubr.f32.gmra.mrb[0].mxu0 %v561
        %v654 = vpop.f32.mrb[0].mxu0
        %v655 = vadd.f32 %v586, %v654
        %v656 = vpop.f32.mrb[0].mxu0
        %657 = vmatprep.mubr.f32.mxu0 0.0
        %658 = vmatmul.mubr.f32.gmra.mrb[0].mxu0 %v562
        %v659 = vpop.f32.mrb[0].mxu0
        %v660 = vadd.f32 %v586, %v659
        %v661 = vpop.f32.mrb[0].mxu0
        %662 = vmatprep.mubr.f32.mxu0 0.0
        %663 = vmatmul.mubr.f32.gmra.mrb[0].mxu0 %v563
        %v664 = vpop.f32.mrb[0].mxu0
        %v665 = vadd.f32 %v586, %v664
        %v666 = vpop.f32.mrb[0].mxu0
        %667 = vmatprep.mubr.f32.mxu0 0.0
        %668 = vmatmul.mubr.f32.gmra.mrb[0].mxu0 %v564
        %v669 = vpop.f32.mrb[0].mxu0
        %v670 = vadd.f32 %v586, %v669
        %v671 = vpop.f32.mrb[0].mxu0
        %672 = vdwg.mxu0
        %673 = vst [vmem:[%s316] sm:$0xff] %v655
        %674 = vst [vmem:[%s316 + $0x8] sm:$0xff] %v660
        %675 = vst [vmem:[%s316 + $0x10] sm:$0xff] %v665
        %676 = vst [vmem:[%s316 + $0x18] sm:$0xff] %v670
        %s677 = sand.u32 %s183, 1
        %s678 = scalar_lea.sflag [#allocation5], %s677
        %s679 = sand.u32 %s183, 1
        %s680 = smul.addr %s679, 32
        %s681 = scalar_lea.vmem [#allocation9], %s680
        // Predicated region
        $region61: #{tpu_custom_call.1} parent=47 // pred_check
          %p682 = pneg %p193
        $region62: #{tpu_custom_call.1} parent=47 // pred_check_branch
          %684 = sbr.rel (%p682) target = $region64
        $region63: #{tpu_custom_call.1} parent=47 // pred_region
          %s685 = smul.u32 4, %s23
          %s687 = ssub.s32 512, 512
          %688 = vsyncadd %s678, %s687
          %s689 = smul.addr %s685, 128
          %s690 = scalar_lea.hbm %s7, %s689
          %s691 = sshll.u32 %s681, 4
          %s692 = int_to_ptr.vmem [resolvable:$true] %s691
          %697 = dma.vmem_to_hbm [thread:$0]  %s692, 512, %s690, %s678, 128, 128, 8
        $region64: #{tpu_custom_call.1} parent=47 // pred_fallthru
          _
      $region48: #{tpu_custom_call.1} parent=5 // pred_fallthru
        _
      %p698 = scmp.le.s32.totalorder 2, %s18
      // Predicated region
      $region65: #{tpu_custom_call.1} parent=5 // pred_check
        %p699 = pneg %p698
      $region66: #{tpu_custom_call.1} parent=5 // pred_check_branch
        %701 = sbr.rel (%p699) target = $region68
      $region67: #{tpu_custom_call.1} parent=5 // pred_region
        %s702 = ssub.s32 %s18, 2
        // Predicated region
        $region69: #{tpu_custom_call.1} parent=67 // pred_check
          %p703 = pneg %p199
        $region70: #{tpu_custom_call.1} parent=67 // pred_check_branch
          %705 = sbr.rel (%p703) target = $region72
        $region71: #{tpu_custom_call.1} parent=67 // pred_region
          %s706 = sand.u32 %s184, 1
          %s707 = scalar_lea.sflag [#allocation5], %s706
          %s708 = sand.u32 %s184, 1
          %s709 = smul.addr %s708, 32
          %s710 = scalar_lea.vmem [#allocation9], %s709
          %711 = dma.done %s707, 512
        $region72: #{tpu_custom_call.1} parent=67 // pred_fallthru
          _
      $region68: #{tpu_custom_call.1} parent=5 // pred_fallthru
        _
    $region6: #{tpu_custom_call.1} parent=1 // loop_footer
      %s22 = sadd.s32 1, %s18
    $region7: #{tpu_custom_call.1} parent=1 // loop_footer_branch
      %17 = sbr.rel target = $region3
    $region8: #{tpu_custom_call.1} parent=1 // loop_exit
      _
    %712 = vsyncpa [#allocation4], 1
    %s713 = scalar_lea.sflag [#allocation4], 1
    %714 = vsyncpa %s713, 1
    %715 = vsyncpa [#allocation7], 1
    %716 = vsyncpa [#allocation5], 1
    %s717 = scalar_lea.sflag [#allocation5], 1
    %718 = vsyncpa %s717, 1

// kernel: tpu_custom_call.1
$region0: #{tpu_custom_call.1}
  #allocation0 [shape = 'u32[]', space=smem, size = 0x4, offset = 0x4, fixed_abs, tag = 'smem constant byte address 0x4 - core index']
  #allocation1 [shape = 'u32[144,128]{1,0:T(1,128)}', space=vmem, size = 0x12000, scoped, tag = 'internal scratch']
  #allocation2 [shape = 'f32[32,128]{1,0:T(8,128)}', space=vmem, size = 0x4000, scoped, tag = 'scratch operand']
  %s0 = inlined_call_operand.vmem [shape: f32[64,4], index: 0, kind: input, shape index: {}]
  %s1 = inlined_call_operand.hbm [shape: f32[128,128], index: 1, kind: input, shape index: {}]
  %s2 = inlined_call_operand.hbm [shape: f32[128,128], index: 2, kind: input, shape index: {}]
  %s3 = inlined_call_operand.hbm [shape: f32[128,128], index: 3, kind: input, shape index: {}]
  %s4 = inlined_call_operand.vmem [shape: f32[1,128], index: 4, kind: input, shape index: {}]
  %s5 = inlined_call_operand.vmem [shape: f32[1,128], index: 5, kind: input, shape index: {}]
  %s6 = inlined_call_operand.vmem [shape: f32[1,128], index: 6, kind: input, shape index: {}]
  %s7 = inlined_call_operand.hbm [shape: f32[64,128], index: 7, kind: output, shape index: {}]
  %s8 = sld [smem:[#allocation0]]
  $region73: #{tpu_custom_call.1} parent=0
    _
  %s10 = ssub.s32 1, %s8
  %s11 = scalar_select 0, %s10, %s8
  $region1: #{tpu_custom_call.1} parent=0
    #allocation3 [shape = 'u8[65536]{0}', space=vmem, size = 0x10000, scoped, tag = 'input window, operand 1, single buffered']
    #allocation4 [shape = 's32[2]{0}', space=sflag, size = 0x8, scoped, tag = 'scoped memory for tpu_custom_call.1']
    #allocation5 [shape = 's32[2]{0}', space=sflag, size = 0x8, scoped, tag = 'scoped memory for tpu_custom_call.1']
    #allocation6 [shape = 'u8[65536]{0}', space=vmem, size = 0x10000, scoped, tag = 'input window, operand 2, single buffered']
    #allocation7 [shape = 's32[1]{0}', space=sflag, size = 0x4, scoped, tag = 'scoped memory for tpu_custom_call.1']
    #allocation8 [shape = 'u8[65536]{0}', space=vmem, size = 0x10000, scoped, tag = 'input window, operand 3, single buffered']
    #allocation9 [shape = 'u8[32768]{0}', space=vmem, size = 0x8000, scoped, tag = 'output window, operand 0']
    %12 = vsyncpa [#allocation4], 0
    %13 = vsyncpa [#allocation7], 0
    %14 = vsyncpa [#allocation5], 0
    %s15 = scalar_lea.sflag [#allocation5], 1
    %16 = vsyncpa %s15, 0
    loop: start=0, step=1, limit=4
    $region2: #{tpu_custom_call.1} parent=1 // loop_pre_header
      _
    $region3: #{tpu_custom_call.1} parent=1 // loop_header
      %s18 = sphi 0, %s22
      %p19 = scmp.ge.s32.totalorder %s18, 4
      %s28 = sphi 0, %s30
      %s31 = sphi 0, %s28
      %s32 = sphi 0, %s31
      %s48 = sphi 0, %s32
      %s52 = sphi 0, %s52
      %s54 = sphi 0, %s52
      %s55 = sphi 0, %s54
      %s69 = sphi 0, %s55
      %s73 = sphi 0, %s73
      %s75 = sphi 0, %s73
      %s76 = sphi 0, %s75
      %s90 = sphi 0, %s76
      %s94 = sphi 0, %s94
      %s96 = sphi 0, %s94
      %s97 = sphi 0, %s96
      %s111 = sphi 0, %s97
      %s115 = sphi 0, %s115
      %s117 = sphi 0, %s115
      %s118 = sphi 0, %s117
      %s132 = sphi 0, %s118
      %s136 = sphi 0, %s136
      %s138 = sphi 0, %s136
      %s139 = sphi 0, %s138
      %s153 = sphi 0, %s139
      %s157 = sphi 0, %s157
      %s159 = sphi 0, %s157
      %s160 = sphi 0, %s159
      %s174 = sphi 0, %s160
      %s180 = sphi 0, %s182
      %s183 = sphi 0, %s180
      %s184 = sphi 0, %s183
      %s200 = sphi 0, %s184
    $region4: #{tpu_custom_call.1} parent=1 // loop_header_branch
      %21 = sbr.rel (%p19) target = $region8
    $region5: #{tpu_custom_call.1} parent=1 // loop_body
      %s23 = ssub.s32 %s18, 1
      %s24 = ssub.s32 %s18, 2
      %s25 = sadd.s32 %s18, 1
      %s26 = ssub.s32 %s18, %s25
      %p27 = scmp.eq.s32.totalorder %s26, 0
      %s29 = sadd.s32 %s28, 1
      %s30 = scalar_select %p27, %s28, %s29
      %p33 = pneg %p27
      %p34 = scmp.eq.s32.totalorder %s18, 1
      %p35 = por %p33, %p34
      %p36 = scmp.ne.s32.totalorder %s28, %s31
      %p37 = scmp.eq.s32.totalorder %s18, 0
      %p38 = por %p36, %p37
      %p39 = scmp.ne.s32.totalorder %s28, %s31
      %p40 = scmp.eq.s32.totalorder %s23, 1
      %p41 = por %p39, %p40
      %p42 = scmp.ne.s32.totalorder %s31, %s32
      %p43 = scmp.eq.s32.totalorder %s23, 0
      %p44 = por %p42, %p43
      %p45 = scmp.ne.s32.totalorder %s31, %s32
      %p46 = scmp.eq.s32.totalorder %s24, 1
      %p47 = por %p45, %p46
      %p49 = scmp.ne.s32.totalorder %s32, %s48
      %p50 = scmp.eq.s32.totalorder %s24, 0
      %p51 = por %p49, %p50
      %s53 = sadd.s32 %s52, 1
      %p56 = scmp.eq.s32.totalorder %s18, 1
      %p57 = scmp.ne.s32.totalorder %s52, %s54
      %p58 = scmp.eq.s32.totalorder %s18, 0
      %p59 = por %p57, %p58
      %p60 = scmp.ne.s32.totalorder %s52, %s54
      %p61 = scmp.eq.s32.totalorder %s23, 1
      %p62 = por %p60, %p61
      %p63 = scmp.ne.s32.totalorder %s54, %s55
      %p64 = scmp.eq.s32.totalorder %s23, 0
      %p65 = por %p63, %p64
      %p66 = scmp.ne.s32.totalorder %s54, %s55
      %p67 = scmp.eq.s32.totalorder %s24, 1
      %p68 = por %p66, %p67
      %p70 = scmp.ne.s32.totalorder %s55, %s69
      %p71 = scmp.eq.s32.totalorder %s24, 0
      %p72 = por %p70, %p71
      %s74 = sadd.s32 %s73, 1
      %p77 = scmp.eq.s32.totalorder %s18, 1
      %p78 = scmp.ne.s32.totalorder %s73, %s75
      %p79 = scmp.eq.s32.totalorder %s18, 0
      %p80 = por %p78, %p79
      %p81 = scmp.ne.s32.totalorder %s73, %s75
      %p82 = scmp.eq.s32.totalorder %s23, 1
      %p83 = por %p81, %p82
      %p84 = scmp.ne.s32.totalorder %s75, %s76
      %p85 = scmp.eq.s32.totalorder %s23, 0
      %p86 = por %p84, %p85
      %p87 = scmp.ne.s32.totalorder %s75, %s76
      %p88 = scmp.eq.s32.totalorder %s24, 1
      %p89 = por %p87, %p88
      %p91 = scmp.ne.s32.totalorder %s76, %s90
      %p92 = scmp.eq.s32.totalorder %s24, 0
      %p93 = por %p91, %p92
      %s95 = sadd.s32 %s94, 1
      %p98 = scmp.eq.s32.totalorder %s18, 1
      %p99 = scmp.ne.s32.totalorder %s94, %s96
      %p100 = scmp.eq.s32.totalorder %s18, 0
      %p101 = por %p99, %p100
      %p102 = scmp.ne.s32.totalorder %s94, %s96
      %p103 = scmp.eq.s32.totalorder %s23, 1
      %p104 = por %p102, %p103
      %p105 = scmp.ne.s32.totalorder %s96, %s97
      %p106 = scmp.eq.s32.totalorder %s23, 0
      %p107 = por %p105, %p106
      %p108 = scmp.ne.s32.totalorder %s96, %s97
      %p109 = scmp.eq.s32.totalorder %s24, 1
      %p110 = por %p108, %p109
      %p112 = scmp.ne.s32.totalorder %s97, %s111
      %p113 = scmp.eq.s32.totalorder %s24, 0
      %p114 = por %p112, %p113
      %s116 = sadd.s32 %s115, 1
      %p119 = scmp.eq.s32.totalorder %s18, 1
      %p120 = scmp.ne.s32.totalorder %s115, %s117
      %p121 = scmp.eq.s32.totalorder %s18, 0
      %p122 = por %p120, %p121
      %p123 = scmp.ne.s32.totalorder %s115, %s117
      %p124 = scmp.eq.s32.totalorder %s23, 1
      %p125 = por %p123, %p124
      %p126 = scmp.ne.s32.totalorder %s117, %s118
      %p127 = scmp.eq.s32.totalorder %s23, 0
      %p128 = por %p126, %p127
      %p129 = scmp.ne.s32.totalorder %s117, %s118
      %p130 = scmp.eq.s32.totalorder %s24, 1
      %p131 = por %p129, %p130
      %p133 = scmp.ne.s32.totalorder %s118, %s132
      %p134 = scmp.eq.s32.totalorder %s24, 0
      %p135 = por %p133, %p134
      %s137 = sadd.s32 %s136, 1
      %p140 = scmp.eq.s32.totalorder %s18, 1
      %p141 = scmp.ne.s32.totalorder %s136, %s138
      %p142 = scmp.eq.s32.totalorder %s18, 0
      %p143 = por %p141, %p142
      %p144 = scmp.ne.s32.totalorder %s136, %s138
      %p145 = scmp.eq.s32.totalorder %s23, 1
      %p146 = por %p144, %p145
      %p147 = scmp.ne.s32.totalorder %s138, %s139
      %p148 = scmp.eq.s32.totalorder %s23, 0
      %p149 = por %p147, %p148
      %p150 = scmp.ne.s32.totalorder %s138, %s139
      %p151 = scmp.eq.s32.totalorder %s24, 1
      %p152 = por %p150, %p151
      %p154 = scmp.ne.s32.totalorder %s139, %s153
      %p155 = scmp.eq.s32.totalorder %s24, 0
      %p156 = por %p154, %p155
      %s158 = sadd.s32 %s157, 1
      %p161 = scmp.eq.s32.totalorder %s18, 1
      %p162 = scmp.ne.s32.totalorder %s157, %s159
      %p163 = scmp.eq.s32.totalorder %s18, 0
      %p164 = por %p162, %p163
      %p165 = scmp.ne.s32.totalorder %s157, %s159
      %p166 = scmp.eq.s32.totalorder %s23, 1
      %p167 = por %p165, %p166
      %p168 = scmp.ne.s32.totalorder %s159, %s160
      %p169 = scmp.eq.s32.totalorder %s23, 0
      %p170 = por %p168, %p169
      %p171 = scmp.ne.s32.totalorder %s159, %s160
      %p172 = scmp.eq.s32.totalorder %s24, 1
      %p173 = por %p171, %p172
      %p175 = scmp.ne.s32.totalorder %s160, %s174
      %p176 = scmp.eq.s32.totalorder %s24, 0
      %p177 = por %p175, %p176
      %s178 = ssub.s32 %s18, %s25
      %p179 = scmp.eq.s32.totalorder %s178, 0
      %s181 = sadd.s32 %s180, 1
      %s182 = scalar_select %p179, %s180, %s181
      %p185 = pneg %p179
      %p186 = scmp.eq.s32.totalorder %s18, 1
      %p187 = por %p185, %p186
      %p188 = scmp.ne.s32.totalorder %s180, %s183
      %p189 = scmp.eq.s32.totalorder %s18, 0
      %p190 = por %p188, %p189
      %p191 = scmp.ne.s32.totalorder %s180, %s183
      %p192 = scmp.eq.s32.totalorder %s23, 1
      %p193 = por %p191, %p192
      %p194 = scmp.ne.s32.totalorder %s183, %s184
      %p195 = scmp.eq.s32.totalorder %s23, 0
      %p196 = por %p194, %p195
      %p197 = scmp.ne.s32.totalorder %s183, %s184
      %p198 = scmp.eq.s32.totalorder %s24, 1
      %p199 = por %p197, %p198
      %p201 = scmp.ne.s32.totalorder %s184, %s200
      %p202 = scmp.eq.s32.totalorder %s24, 0
      %p203 = por %p201, %p202
      %p204 = scmp.le.s32.totalorder 1, %s18
      %p205 = scmp.lt.s32.totalorder %s18, 3
      %p206 = pnand %p204, %p205
      %p207 = pneg %p206
      // Predicated region
      $region9: #{tpu_custom_call.1} parent=5 // pred_check
        _
      $region10: #{tpu_custom_call.1} parent=5 // pred_check_branch
        %209 = sbr.rel (%p206) target = $region12
      $region11: #{tpu_custom_call.1} parent=5 // pred_region
        %s210 = ssub.s32 %s18, 1
        // Predicated region
        $region13: #{tpu_custom_call.1} parent=11 // pred_check
          %p211 = pneg %p65
        $region14: #{tpu_custom_call.1} parent=11 // pred_check_branch
          %213 = sbr.rel (%p211) target = $region16
        $region15: #{tpu_custom_call.1} parent=11 // pred_region
          %s215 = ssub.s32 2048, 2048
          %216 = vsyncadd [#allocation4], %s215
          %s217 = sshll.u32 [#allocation3], 4
          %s218 = int_to_ptr.vmem [resolvable:$true] %s217
          %223 = dma.hbm_to_vmem [thread:$0]  %s1, 2048, %s218, [#allocation4], 128, 128, 8
        $region16: #{tpu_custom_call.1} parent=11 // pred_fallthru
          _
        // Predicated region
        $region17: #{tpu_custom_call.1} parent=11 // pred_check
          %p224 = pneg %p86
        $region18: #{tpu_custom_call.1} parent=11 // pred_check_branch
          %226 = sbr.rel (%p224) target = $region20
        $region19: #{tpu_custom_call.1} parent=11 // pred_region
          %s228 = ssub.s32 2048, 2048
          %229 = vsyncadd [#allocation7], %s228
          %s230 = sshll.u32 [#allocation6], 4
          %s231 = int_to_ptr.vmem [resolvable:$true] %s230
          %236 = dma.hbm_to_vmem [thread:$0]  %s2, 2048, %s231, [#allocation7], 128, 128, 8
        $region20: #{tpu_custom_call.1} parent=11 // pred_fallthru
          _
        // Predicated region
        $region21: #{tpu_custom_call.1} parent=11 // pred_check
          %p237 = pneg %p107
        $region22: #{tpu_custom_call.1} parent=11 // pred_check_branch
          %239 = sbr.rel (%p237) target = $region24
        $region23: #{tpu_custom_call.1} parent=11 // pred_region
          %s241 = ssub.s32 2048, 2048
          %242 = vsyncadd [#allocation7], %s241
          %s243 = sshll.u32 [#allocation8], 4
          %s244 = int_to_ptr.vmem [resolvable:$true] %s243
          %249 = dma.hbm_to_vmem [thread:$0]  %s3, 2048, %s244, [#allocation7], 128, 128, 8
        $region24: #{tpu_custom_call.1} parent=11 // pred_fallthru
          _
        // Predicated region
        $region25: #{tpu_custom_call.1} parent=11 // pred_check
          %p250 = pneg %p128
        $region26: #{tpu_custom_call.1} parent=11 // pred_check_branch
          %252 = sbr.rel (%p250) target = $region28
        $region27: #{tpu_custom_call.1} parent=11 // pred_region
          _
        $region28: #{tpu_custom_call.1} parent=11 // pred_fallthru
          _
        // Predicated region
        $region29: #{tpu_custom_call.1} parent=11 // pred_check
          %p253 = pneg %p149
        $region30: #{tpu_custom_call.1} parent=11 // pred_check_branch
          %255 = sbr.rel (%p253) target = $region32
        $region31: #{tpu_custom_call.1} parent=11 // pred_region
          _
        $region32: #{tpu_custom_call.1} parent=11 // pred_fallthru
          _
        // Predicated region
        $region33: #{tpu_custom_call.1} parent=11 // pred_check
          %p256 = pneg %p170
        $region34: #{tpu_custom_call.1} parent=11 // pred_check_branch
          %258 = sbr.rel (%p256) target = $region36
        $region35: #{tpu_custom_call.1} parent=11 // pred_region
          _
        $region36: #{tpu_custom_call.1} parent=11 // pred_fallthru
          _
      $region12: #{tpu_custom_call.1} parent=5 // pred_fallthru
        _
      %p259 = scmp.lt.s32.totalorder %s18, 2
      // Predicated region
      $region37: #{tpu_custom_call.1} parent=5 // pred_check
        %p260 = pneg %p259
      $region38: #{tpu_custom_call.1} parent=5 // pred_check_branch
        %262 = sbr.rel (%p260) target = $region40
      $region39: #{tpu_custom_call.1} parent=5 // pred_region
        // Predicated region
        $region41: #{tpu_custom_call.1} parent=39 // pred_check
          %p263 = pneg %p38
        $region42: #{tpu_custom_call.1} parent=39 // pred_check_branch
          %265 = sbr.rel (%p263) target = $region44
        $region43: #{tpu_custom_call.1} parent=39 // pred_region
          %s266 = smul.u32 4, %s18
          %p267 = scmp.lt.s32.totalorder %s266, 7
          %s268 = scalar_select %p267, %s266, 7
          %s269 = smul.addr %s268, 8
          %s270 = scalar_lea.vmem %s0, %s269
          %s271 = smul.u32 4, %s18
        $region44: #{tpu_custom_call.1} parent=39 // pred_fallthru
          _
      $region40: #{tpu_custom_call.1} parent=5 // pred_fallthru
        _
      %p272 = scmp.le.s32.totalorder 1, %s18
      %p273 = scmp.lt.s32.totalorder %s18, 3
      %p274 = pnand %p272, %p273
      %p275 = pneg %p274
      // Predicated region
      $region45: #{tpu_custom_call.1} parent=5 // pred_check
        _
      $region46: #{tpu_custom_call.1} parent=5 // pred_check_branch
        %277 = sbr.rel (%p274) target = $region48
      $region47: #{tpu_custom_call.1} parent=5 // pred_region
        %s278 = ssub.s32 %s18, 1
        // Predicated region
        $region49: #{tpu_custom_call.1} parent=47 // pred_check
          %p279 = pneg %p65
        $region50: #{tpu_custom_call.1} parent=47 // pred_check_branch
          %281 = sbr.rel (%p279) target = $region52
        $region51: #{tpu_custom_call.1} parent=47 // pred_region
          %282 = dma.done [#allocation4], 2048
        $region52: #{tpu_custom_call.1} parent=47 // pred_fallthru
          _
        // Predicated region
        $region53: #{tpu_custom_call.1} parent=47 // pred_check
          %p283 = pneg %p86
        $region54: #{tpu_custom_call.1} parent=47 // pred_check_branch
          %285 = sbr.rel (%p283) target = $region56
        $region55: #{tpu_custom_call.1} parent=47 // pred_region
          %286 = dma.done [#allocation7], 2048
        $region56: #{tpu_custom_call.1} parent=47 // pred_fallthru
          _
        // Predicated region
        $region57: #{tpu_custom_call.1} parent=47 // pred_check
          %p287 = pneg %p107
        $region58: #{tpu_custom_call.1} parent=47 // pred_check_branch
          %289 = sbr.rel (%p287) target = $region60
        $region59: #{tpu_custom_call.1} parent=47 // pred_region
          %290 = dma.done [#allocation7], 2048
        $region60: #{tpu_custom_call.1} parent=47 // pred_fallthru
          _
        %s291 = smul.u32 4, %s23
        %p292 = scmp.lt.s32.totalorder %s291, 7
        %s293 = scalar_select %p292, %s291, 7
        %s294 = smul.addr %s293, 8
        %s295 = scalar_lea.vmem %s0, %s294
        %p296 = pneg %p44
        %p297 = pneg %p41
        %p298 = pneg %p65
        %p299 = pneg %p62
        %p300 = pneg %p86
        %p301 = pneg %p83
        %p302 = pneg %p107
        %p303 = pneg %p104
        %p304 = pneg %p128
        %p305 = pneg %p125
        %p306 = pneg %p149
        %p307 = pneg %p146
        %p308 = pneg %p170
        %p309 = pneg %p167
        %p310 = pneg %p196
        %p311 = pneg %p193
        %s312 = sand.u32 %s183, 1
        %s313 = scalar_lea.sflag [#allocation5], %s312
        %s314 = sand.u32 %s183, 1
        %s315 = smul.addr %s314, 32
        %s316 = scalar_lea.vmem [#allocation9], %s315
        %s317 = smul.u32 4, %s23
        %p318 = scmp.lt.s32.totalorder %s317, 7
        %s319 = scalar_select %p318, %s317, 7
        %s320 = smul.addr %s319, 8
        %s321 = scalar_lea.vmem %s0, %s320
        %s322 = smul.u32 4, %s23
        %s323 = smul.u32 4, %s23
        %324 = vst [vmem:[#allocation2] sm:$0xff] 0.0
        %325 = vst [vmem:[#allocation2 + $0x8] sm:$0xff] 0.0
        %326 = vst [vmem:[#allocation2 + $0x10] sm:$0xff] 0.0
        %327 = vst [vmem:[#allocation2 + $0x18] sm:$0xff] 0.0
        %v328 = vld [vmem:[%s321] sm:$0xff]
        %v329 = vld [vmem:[%s321 + $0x8] sm:$0xff]
        %v330 = vld [vmem:[%s321 + $0x10] sm:$0xff]
        %v331 = vld [vmem:[%s321 + $0x18] sm:$0xff]
        %vm332 = vcmask 31744
        %333 = vst.msk [vmem:[#allocation2] sm:$0xff] %vm332, %v328
        %334 = vst.msk [vmem:[#allocation2 + $0x8] sm:$0xff] %vm332, %v329
        %335 = vst.msk [vmem:[#allocation2 + $0x10] sm:$0xff] %vm332, %v330
        %336 = vst.msk [vmem:[#allocation2 + $0x18] sm:$0xff] %vm332, %v331
        %v337 = vld [vmem:[#allocation2] sm:$0xff]
        %v338 = vld [vmem:[#allocation2 + $0x8] sm:$0xff]
        %v339 = vld [vmem:[#allocation2 + $0x10] sm:$0xff]
        %v340 = vld [vmem:[#allocation2 + $0x18] sm:$0xff]
        %v341 = vld [vmem:[#allocation3] sm:$0xff]
        %v342 = vld [vmem:[#allocation3 + $0x8] sm:$0xff]
        %v343 = vld [vmem:[#allocation3 + $0x10] sm:$0xff]
        %v344 = vld [vmem:[#allocation3 + $0x18] sm:$0xff]
        %v345 = vld [vmem:[#allocation3 + $0x20] sm:$0xff]
        %v346 = vld [vmem:[#allocation3 + $0x28] sm:$0xff]
        %v347 = vld [vmem:[#allocation3 + $0x30] sm:$0xff]
        %v348 = vld [vmem:[#allocation3 + $0x38] sm:$0xff]
        %v349 = vld [vmem:[#allocation3 + $0x40] sm:$0xff]
        %v350 = vld [vmem:[#allocation3 + $0x48] sm:$0xff]
        %v351 = vld [vmem:[#allocation3 + $0x50] sm:$0xff]
        %v352 = vld [vmem:[#allocation3 + $0x58] sm:$0xff]
        %v353 = vld [vmem:[#allocation3 + $0x60] sm:$0xff]
        %v354 = vld [vmem:[#allocation3 + $0x68] sm:$0xff]
        %v355 = vld [vmem:[#allocation3 + $0x70] sm:$0xff]
        %v356 = vld [vmem:[#allocation3 + $0x78] sm:$0xff]
        %v357 = vld [vmem:[%s4] sm:$0x1]
        %v359 = vlaneseq
        %v360 = vshrl.u32 %v359, 7
        %v361 = vsub.s32 0, %v360
        %v362 = vrot.slane %v357, %v361
        %364 = vmatprep.subr.mxu0 0.0
        %365 = vmatpush1.msra.mxu0 %v341
        %366 = vmatprep.subr.mxu0 0.0
        %367 = vmatpush1.msra.mxu0 %v342
        %368 = vmatprep.subr.mxu0 0.0
        %369 = vmatpush1.msra.mxu0 %v343
        %370 = vmatprep.subr.mxu0 0.0
        %371 = vmatpush1.msra.mxu0 %v344
        %372 = vmatprep.subr.mxu0 0.0
        %373 = vmatpush1.msra.mxu0 %v345
        %374 = vmatprep.subr.mxu0 0.0
        %375 = vmatpush1.msra.mxu0 %v346
        %376 = vmatprep.subr.mxu0 0.0
        %377 = vmatpush1.msra.mxu0 %v347
        %378 = vmatprep.subr.mxu0 0.0
        %379 = vmatpush1.msra.mxu0 %v348
        %380 = vmatprep.subr.mxu0 0.0
        %381 = vmatpush1.msra.mxu0 %v349
        %382 = vmatprep.subr.mxu0 0.0
        %383 = vmatpush1.msra.mxu0 %v350
        %384 = vmatprep.subr.mxu0 0.0
        %385 = vmatpush1.msra.mxu0 %v351
        %386 = vmatprep.subr.mxu0 0.0
        %387 = vmatpush1.msra.mxu0 %v352
        %388 = vmatprep.subr.mxu0 0.0
        %389 = vmatpush1.msra.mxu0 %v353
        %390 = vmatprep.subr.mxu0 0.0
        %391 = vmatpush1.msra.mxu0 %v354
        %392 = vmatprep.subr.mxu0 0.0
        %393 = vmatpush1.msra.mxu0 %v355
        %394 = vmatprep.subr.mxu0 0.0
        %395 = vmatpush1.msra.mxu0 %v356
        %396 = vmatprep.subr.mxu0 0.0
        %397 = vmatpush1.msra.mxu0 0.0
        %398 = vmatprep.subr.mxu0 0.0
        %399 = vmatpush1.msra.mxu0 0.0
        %400 = vmatprep.subr.mxu0 0.0
        %401 = vmatpush1.msra.mxu0 0.0
        %402 = vmatprep.subr.mxu0 0.0
        %403 = vmatpush1.msra.mxu0 0.0
        %404 = vmatprep.subr.mxu0 0.0
        %405 = vmatpush1.msra.mxu0 0.0
        %406 = vmatprep.subr.mxu0 0.0
        %407 = vmatpush1.msra.mxu0 0.0
        %408 = vmatprep.subr.mxu0 0.0
        %409 = vmatpush1.msra.mxu0 0.0
        %410 = vmatprep.subr.mxu0 0.0
        %411 = vmatpush1.msra.mxu0 0.0
        %412 = vmatprep.subr.mxu0 0.0
        %413 = vmatpush1.msra.mxu0 0.0
        %414 = vmatprep.subr.mxu0 0.0
        %415 = vmatpush1.msra.mxu0 0.0
        %416 = vmatprep.subr.mxu0 0.0
        %417 = vmatpush1.msra.mxu0 0.0
        %418 = vmatprep.subr.mxu0 0.0
        %419 = vmatpush1.msra.mxu0 0.0
        %420 = vmatprep.subr.mxu0 0.0
        %421 = vmatpush1.msra.mxu0 0.0
        %422 = vmatprep.subr.mxu0 0.0
        %423 = vmatpush1.msra.mxu0 0.0
        %424 = vmatprep.subr.mxu0 0.0
        %425 = vmatpush1.msra.mxu0 0.0
        %426 = vmatprep.subr.mxu0 0.0
        %427 = vmatpush1.msra.mxu0 0.0
        %428 = vmatprep.mubr.f32.mxu0 0.0
        %429 = vmatmul.mubr.f32.gmra.mrb[0].mxu0 %v337
        %v430 = vpop.f32.mrb[0].mxu0
        %v431 = vadd.f32 %v362, %v430
        %v432 = vpop.f32.mrb[0].mxu0
        %433 = vmatprep.mubr.f32.mxu0 0.0
        %434 = vmatmul.mubr.f32.gmra.mrb[0].mxu0 %v338
        %v435 = vpop.f32.mrb[0].mxu0
        %v436 = vadd.f32 %v362, %v435
        %v437 = vpop.f32.mrb[0].mxu0
        %438 = vmatprep.mubr.f32.mxu0 0.0
        %439 = vmatmul.mubr.f32.gmra.mrb[0].mxu0 %v339
        %v440 = vpop.f32.mrb[0].mxu0
        %v441 = vadd.f32 %v362, %v440
        %v442 = vpop.f32.mrb[0].mxu0
        %443 = vmatprep.mubr.f32.mxu0 0.0
        %444 = vmatmul.mubr.f32.gmra.mrb[0].mxu0 %v340
        %v445 = vpop.f32.mrb[0].mxu0
        %v446 = vadd.f32 %v362, %v445
        %v447 = vpop.f32.mrb[0].mxu0
        %448 = vdwg.mxu0
        %v449 = vmax.f32 %v431, 0.0
        %v450 = vmax.f32 %v436, 0.0
        %v451 = vmax.f32 %v441, 0.0
        %v452 = vmax.f32 %v446, 0.0
        %v453 = vld [vmem:[#allocation6] sm:$0xff]
        %v454 = vld [vmem:[#allocation6 + $0x8] sm:$0xff]
        %v455 = vld [vmem:[#allocation6 + $0x10] sm:$0xff]
        %v456 = vld [vmem:[#allocation6 + $0x18] sm:$0xff]
        %v457 = vld [vmem:[#allocation6 + $0x20] sm:$0xff]
        %v458 = vld [vmem:[#allocation6 + $0x28] sm:$0xff]
        %v459 = vld [vmem:[#allocation6 + $0x30] sm:$0xff]
        %v460 = vld [vmem:[#allocation6 + $0x38] sm:$0xff]
        %v461 = vld [vmem:[#allocation6 + $0x40] sm:$0xff]
        %v462 = vld [vmem:[#allocation6 + $0x48] sm:$0xff]
        %v463 = vld [vmem:[#allocation6 + $0x50] sm:$0xff]
        %v464 = vld [vmem:[#allocation6 + $0x58] sm:$0xff]
        %v465 = vld [vmem:[#allocation6 + $0x60] sm:$0xff]
        %v466 = vld [vmem:[#allocation6 + $0x68] sm:$0xff]
        %v467 = vld [vmem:[#allocation6 + $0x70] sm:$0xff]
        %v468 = vld [vmem:[#allocation6 + $0x78] sm:$0xff]
        %v469 = vld [vmem:[%s5] sm:$0x1]
        %v471 = vlaneseq
        %v472 = vshrl.u32 %v471, 7
        %v473 = vsub.s32 0, %v472
        %v474 = vrot.slane %v469, %v473
        %476 = vmatprep.subr.mxu0 0.0
        %477 = vmatpush1.msra.mxu0 %v453
        %478 = vmatprep.subr.mxu0 0.0
        %479 = vmatpush1.msra.mxu0 %v454
        %480 = vmatprep.subr.mxu0 0.0
        %481 = vmatpush1.msra.mxu0 %v455
        %482 = vmatprep.subr.mxu0 0.0
        %483 = vmatpush1.msra.mxu0 %v456
        %484 = vmatprep.subr.mxu0 0.0
        %485 = vmatpush1.msra.mxu0 %v457
        %486 = vmatprep.subr.mxu0 0.0
        %487 = vmatpush1.msra.mxu0 %v458
        %488 = vmatprep.subr.mxu0 0.0
        %489 = vmatpush1.msra.mxu0 %v459
        %490 = vmatprep.subr.mxu0 0.0
        %491 = vmatpush1.msra.mxu0 %v460
        %492 = vmatprep.subr.mxu0 0.0
        %493 = vmatpush1.msra.mxu0 %v461
        %494 = vmatprep.subr.mxu0 0.0
        %495 = vmatpush1.msra.mxu0 %v462
        %496 = vmatprep.subr.mxu0 0.0
        %497 = vmatpush1.msra.mxu0 %v463
        %498 = vmatprep.subr.mxu0 0.0
        %499 = vmatpush1.msra.mxu0 %v464
        %500 = vmatprep.subr.mxu0 0.0
        %501 = vmatpush1.msra.mxu0 %v465
        %502 = vmatprep.subr.mxu0 0.0
        %503 = vmatpush1.msra.mxu0 %v466
        %504 = vmatprep.subr.mxu0 0.0
        %505 = vmatpush1.msra.mxu0 %v467
        %506 = vmatprep.subr.mxu0 0.0
        %507 = vmatpush1.msra.mxu0 %v468
        %508 = vmatprep.subr.mxu0 0.0
        %509 = vmatpush1.msra.mxu0 0.0
        %510 = vmatprep.subr.mxu0 0.0
        %511 = vmatpush1.msra.mxu0 0.0
        %512 = vmatprep.subr.mxu0 0.0
        %513 = vmatpush1.msra.mxu0 0.0
        %514 = vmatprep.subr.mxu0 0.0
        %515 = vmatpush1.msra.mxu0 0.0
        %516 = vmatprep.subr.mxu0 0.0
        %517 = vmatpush1.msra.mxu0 0.0
        %518 = vmatprep.subr.mxu0 0.0
        %519 = vmatpush1.msra.mxu0 0.0
        %520 = vmatprep.subr.mxu0 0.0
        %521 = vmatpush1.msra.mxu0 0.0
        %522 = vmatprep.subr.mxu0 0.0
        %523 = vmatpush1.msra.mxu0 0.0
        %524 = vmatprep.subr.mxu0 0.0
        %525 = vmatpush1.msra.mxu0 0.0
        %526 = vmatprep.subr.mxu0 0.0
        %527 = vmatpush1.msra.mxu0 0.0
        %528 = vmatprep.subr.mxu0 0.0
        %529 = vmatpush1.msra.mxu0 0.0
        %530 = vmatprep.subr.mxu0 0.0
        %531 = vmatpush1.msra.mxu0 0.0
        %532 = vmatprep.subr.mxu0 0.0
        %533 = vmatpush1.msra.mxu0 0.0
        %534 = vmatprep.subr.mxu0 0.0
        %535 = vmatpush1.msra.mxu0 0.0
        %536 = vmatprep.subr.mxu0 0.0
        %537 = vmatpush1.msra.mxu0 0.0
        %538 = vmatprep.subr.mxu0 0.0
        %539 = vmatpush1.msra.mxu0 0.0
        %540 = vmatprep.mubr.f32.mxu0 0.0
        %541 = vmatmul.mubr.f32.gmra.mrb[0].mxu0 %v449
        %v542 = vpop.f32.mrb[0].mxu0
        %v543 = vadd.f32 %v474, %v542
        %v544 = vpop.f32.mrb[0].mxu0
        %545 = vmatprep.mubr.f32.mxu0 0.0
        %546 = vmatmul.mubr.f32.gmra.mrb[0].mxu0 %v450
        %v547 = vpop.f32.mrb[0].mxu0
        %v548 = vadd.f32 %v474, %v547
        %v549 = vpop.f32.mrb[0].mxu0
        %550 = vmatprep.mubr.f32.mxu0 0.0
        %551 = vmatmul.mubr.f32.gmra.mrb[0].mxu0 %v451
        %v552 = vpop.f32.mrb[0].mxu0
        %v553 = vadd.f32 %v474, %v552
        %v554 = vpop.f32.mrb[0].mxu0
        %555 = vmatprep.mubr.f32.mxu0 0.0
        %556 = vmatmul.mubr.f32.gmra.mrb[0].mxu0 %v452
        %v557 = vpop.f32.mrb[0].mxu0
        %v558 = vadd.f32 %v474, %v557
        %v559 = vpop.f32.mrb[0].mxu0
        %560 = vdwg.mxu0
        %v561 = vmax.f32 %v543, 0.0
        %v562 = vmax.f32 %v548, 0.0
        %v563 = vmax.f32 %v553, 0.0
        %v564 = vmax.f32 %v558, 0.0
        %v565 = vld [vmem:[#allocation8] sm:$0xff]
        %v566 = vld [vmem:[#allocation8 + $0x8] sm:$0xff]
        %v567 = vld [vmem:[#allocation8 + $0x10] sm:$0xff]
        %v568 = vld [vmem:[#allocation8 + $0x18] sm:$0xff]
        %v569 = vld [vmem:[#allocation8 + $0x20] sm:$0xff]
        %v570 = vld [vmem:[#allocation8 + $0x28] sm:$0xff]
        %v571 = vld [vmem:[#allocation8 + $0x30] sm:$0xff]
        %v572 = vld [vmem:[#allocation8 + $0x38] sm:$0xff]
        %v573 = vld [vmem:[#allocation8 + $0x40] sm:$0xff]
        %v574 = vld [vmem:[#allocation8 + $0x48] sm:$0xff]
        %v575 = vld [vmem:[#allocation8 + $0x50] sm:$0xff]
        %v576 = vld [vmem:[#allocation8 + $0x58] sm:$0xff]
        %v577 = vld [vmem:[#allocation8 + $0x60] sm:$0xff]
        %v578 = vld [vmem:[#allocation8 + $0x68] sm:$0xff]
        %v579 = vld [vmem:[#allocation8 + $0x70] sm:$0xff]
        %v580 = vld [vmem:[#allocation8 + $0x78] sm:$0xff]
        %v581 = vld [vmem:[%s6] sm:$0x1]
        %v583 = vlaneseq
        %v584 = vshrl.u32 %v583, 7
        %v585 = vsub.s32 0, %v584
        %v586 = vrot.slane %v581, %v585
        %588 = vmatprep.subr.mxu0 0.0
        %589 = vmatpush1.msra.mxu0 %v565
        %590 = vmatprep.subr.mxu0 0.0
        %591 = vmatpush1.msra.mxu0 %v566
        %592 = vmatprep.subr.mxu0 0.0
        %593 = vmatpush1.msra.mxu0 %v567
        %594 = vmatprep.subr.mxu0 0.0
        %595 = vmatpush1.msra.mxu0 %v568
        %596 = vmatprep.subr.mxu0 0.0
        %597 = vmatpush1.msra.mxu0 %v569
        %598 = vmatprep.subr.mxu0 0.0
        %599 = vmatpush1.msra.mxu0 %v570
        %600 = vmatprep.subr.mxu0 0.0
        %601 = vmatpush1.msra.mxu0 %v571
        %602 = vmatprep.subr.mxu0 0.0
        %603 = vmatpush1.msra.mxu0 %v572
        %604 = vmatprep.subr.mxu0 0.0
        %605 = vmatpush1.msra.mxu0 %v573
        %606 = vmatprep.subr.mxu0 0.0
        %607 = vmatpush1.msra.mxu0 %v574
        %608 = vmatprep.subr.mxu0 0.0
        %609 = vmatpush1.msra.mxu0 %v575
        %610 = vmatprep.subr.mxu0 0.0
        %611 = vmatpush1.msra.mxu0 %v576
        %612 = vmatprep.subr.mxu0 0.0
        %613 = vmatpush1.msra.mxu0 %v577
        %614 = vmatprep.subr.mxu0 0.0
        %615 = vmatpush1.msra.mxu0 %v578
        %616 = vmatprep.subr.mxu0 0.0
        %617 = vmatpush1.msra.mxu0 %v579
        %618 = vmatprep.subr.mxu0 0.0
        %619 = vmatpush1.msra.mxu0 %v580
        %620 = vmatprep.subr.mxu0 0.0
        %621 = vmatpush1.msra.mxu0 0.0
        %622 = vmatprep.subr.mxu0 0.0
        %623 = vmatpush1.msra.mxu0 0.0
        %624 = vmatprep.subr.mxu0 0.0
        %625 = vmatpush1.msra.mxu0 0.0
        %626 = vmatprep.subr.mxu0 0.0
        %627 = vmatpush1.msra.mxu0 0.0
        %628 = vmatprep.subr.mxu0 0.0
        %629 = vmatpush1.msra.mxu0 0.0
        %630 = vmatprep.subr.mxu0 0.0
        %631 = vmatpush1.msra.mxu0 0.0
        %632 = vmatprep.subr.mxu0 0.0
        %633 = vmatpush1.msra.mxu0 0.0
        %634 = vmatprep.subr.mxu0 0.0
        %635 = vmatpush1.msra.mxu0 0.0
        %636 = vmatprep.subr.mxu0 0.0
        %637 = vmatpush1.msra.mxu0 0.0
        %638 = vmatprep.subr.mxu0 0.0
        %639 = vmatpush1.msra.mxu0 0.0
        %640 = vmatprep.subr.mxu0 0.0
        %641 = vmatpush1.msra.mxu0 0.0
        %642 = vmatprep.subr.mxu0 0.0
        %643 = vmatpush1.msra.mxu0 0.0
        %644 = vmatprep.subr.mxu0 0.0
        %645 = vmatpush1.msra.mxu0 0.0
        %646 = vmatprep.subr.mxu0 0.0
        %647 = vmatpush1.msra.mxu0 0.0
        %648 = vmatprep.subr.mxu0 0.0
        %649 = vmatpush1.msra.mxu0 0.0
        %650 = vmatprep.subr.mxu0 0.0
        %651 = vmatpush1.msra.mxu0 0.0
        %652 = vmatprep.mubr.f32.mxu0 0.0
        %653 = vmatmul.mubr.f32.gmra.mrb[0].mxu0 %v561
        %v654 = vpop.f32.mrb[0].mxu0
        %v655 = vadd.f32 %v586, %v654
        %v656 = vpop.f32.mrb[0].mxu0
        %657 = vmatprep.mubr.f32.mxu0 0.0
        %658 = vmatmul.mubr.f32.gmra.mrb[0].mxu0 %v562
        %v659 = vpop.f32.mrb[0].mxu0
        %v660 = vadd.f32 %v586, %v659
        %v661 = vpop.f32.mrb[0].mxu0
        %662 = vmatprep.mubr.f32.mxu0 0.0
        %663 = vmatmul.mubr.f32.gmra.mrb[0].mxu0 %v563
        %v664 = vpop.f32.mrb[0].mxu0
        %v665 = vadd.f32 %v586, %v664
        %v666 = vpop.f32.mrb[0].mxu0
        %667 = vmatprep.mubr.f32.mxu0 0.0
        %668 = vmatmul.mubr.f32.gmra.mrb[0].mxu0 %v564
        %v669 = vpop.f32.mrb[0].mxu0
        %v670 = vadd.f32 %v586, %v669
        %v671 = vpop.f32.mrb[0].mxu0
        %672 = vdwg.mxu0
        %673 = vst [vmem:[%s316] sm:$0xff] %v655
        %674 = vst [vmem:[%s316 + $0x8] sm:$0xff] %v660
        %675 = vst [vmem:[%s316 + $0x10] sm:$0xff] %v665
        %676 = vst [vmem:[%s316 + $0x18] sm:$0xff] %v670
        %s677 = sand.u32 %s183, 1
        %s678 = scalar_lea.sflag [#allocation5], %s677
        %s679 = sand.u32 %s183, 1
        %s680 = smul.addr %s679, 32
        %s681 = scalar_lea.vmem [#allocation9], %s680
        // Predicated region
        $region61: #{tpu_custom_call.1} parent=47 // pred_check
          %p682 = pneg %p193
        $region62: #{tpu_custom_call.1} parent=47 // pred_check_branch
          %684 = sbr.rel (%p682) target = $region64
        $region63: #{tpu_custom_call.1} parent=47 // pred_region
          %s685 = smul.u32 4, %s23
          %s687 = ssub.s32 512, 512
          %688 = vsyncadd %s678, %s687
          %s689 = smul.addr %s685, 128
          %s690 = scalar_lea.hbm %s7, %s689
          %s691 = sshll.u32 %s681, 4
          %s692 = int_to_ptr.vmem [resolvable:$true] %s691
          %697 = dma.vmem_to_hbm [thread:$0]  %s692, 512, %s690, %s678, 128, 128, 8
        $region64: #{tpu_custom_call.1} parent=47 // pred_fallthru
          _
      $region48: #{tpu_custom_call.1} parent=5 // pred_fallthru
        _
      %p698 = scmp.le.s32.totalorder 2, %s18
      // Predicated region
      $region65: #{tpu_custom_call.1} parent=5 // pred_check
        %p699 = pneg %p698
      $region66: #{tpu_custom_call.1} parent=5 // pred_check_branch
        %701 = sbr.rel (%p699) target = $region68
      $region67: #{tpu_custom_call.1} parent=5 // pred_region
        %s702 = ssub.s32 %s18, 2
        // Predicated region
        $region69: #{tpu_custom_call.1} parent=67 // pred_check
          %p703 = pneg %p199
        $region70: #{tpu_custom_call.1} parent=67 // pred_check_branch
          %705 = sbr.rel (%p703) target = $region72
        $region71: #{tpu_custom_call.1} parent=67 // pred_region
          %s706 = sand.u32 %s184, 1
          %s707 = scalar_lea.sflag [#allocation5], %s706
          %s708 = sand.u32 %s184, 1
          %s709 = smul.addr %s708, 32
          %s710 = scalar_lea.vmem [#allocation9], %s709
          %711 = dma.done %s707, 512
        $region72: #{tpu_custom_call.1} parent=67 // pred_fallthru
          _
      $region68: #{tpu_custom_call.1} parent=5 // pred_fallthru
        _
    $region6: #{tpu_custom_call.1} parent=1 // loop_footer
      %s22 = sadd.s32 1, %s18
    $region7: #{tpu_custom_call.1} parent=1 // loop_footer_branch
      %17 = sbr.rel target = $region3
    $region8: #{tpu_custom_call.1} parent=1 // loop_exit
      _
    %712 = vsyncpa [#allocation4], 1
    %s713 = scalar_lea.sflag [#allocation4], 1
    %714 = vsyncpa %s713, 1
    %715 = vsyncpa [#allocation7], 1
    %716 = vsyncpa [#allocation5], 1
    %s717 = scalar_lea.sflag [#allocation5], 1
    %718 = vsyncpa %s717, 1

</llo_original>
